<compile_context>
chip_gen: v7x
topology: tpu7x:2x2x1
jax: 0.10.0
libtpu: 0.0.40
codegen_flags: <defaults>
</compile_context>

<pallas_src>
import numpy as np
import jax
import jax.numpy as jnp
from jax import lax
from jax.experimental import pallas as pl
from jax.experimental.pallas import tpu as pltpu

BN_EPS = 1e-5


# ----------------------------------------------------------------------------
# host-side constant operators
# ----------------------------------------------------------------------------
def bilinear_matrix(in_size: int, out_size: int) -> np.ndarray:
    """1-D interpolation matrix of UpsamplingBilinear2d (align_corners=True)."""
    A = np.zeros((out_size, in_size), dtype=np.float32)
    if out_size == 1:
        A[0, 0] = 1.0
        return A
    for i in range(out_size):
        src = i * (in_size - 1) / (out_size - 1)
        x0 = min(max(int(np.floor(src)), 0), in_size - 1)
        x1 = min(x0 + 1, in_size - 1)
        f = src - x0
        A[i, x0] += 1.0 - f
        A[i, x1] += f
    return A


# ----------------------------------------------------------------------------
# fused Pallas kernel (whole UBlock1, whole batch, single step)
# ----------------------------------------------------------------------------
def make_ublock1_kernel(N: int, C: int, MID: int, H: int, W: int):
    L, Hd, Wd = H * W, H // 2, W // 2
    Ld = Hd * Wd
    NL, NLd = N * L, N * Ld
    log2w, log2wd = W.bit_length() - 1, Wd.bit_length() - 1
    f32, bf16 = jnp.float32, jnp.bfloat16

    def shift_lanes(a, off, fill):
        """r[:, p] = a[:, p + off]; lanes shifted in from outside get `fill`."""
        if off == 0:
            return a
        pad = jnp.full((a.shape[0], abs(off)), fill, a.dtype)
        if off > 0:
            return jnp.concatenate([a[:, off:], pad], axis=1)
        return jnp.concatenate([pad, a[:, :off]], axis=1)

    def kernel(x_ref, bd_ref, bu_ref, w1_ref, w3s_ref, w2_ref,
               s0_ref, t0_ref, s1_ref, t1_ref, s2_ref, t2_ref, b3_ref,
               o_ref, stk_ref):
        x = x_ref[...]                                    # (C, N*L) f32, lane = n*L + h*W + w

        # ---- MaxPool2d(3, stride=1, padding=1): separable 3-tap max -----------------
        lane = lax.broadcasted_iota(jnp.int32, (C, NL), 1)
        col = lane & (W - 1)                              # w within row   (power-of-two W)
        row = (lane >> log2w) & (H - 1)                   # h within image (power-of-two H)

        def nbr(a, off, valid):                           # value at lane p+off, -inf if OOB
            return jnp.where(valid, shift_lanes(a, off, -jnp.inf), -jnp.inf)

        mw = jnp.maximum(x, jnp.maximum(nbr(x, -1, col >= 1), nbr(x, 1, col <= W - 2)))
        mp = jnp.maximum(mw, jnp.maximum(nbr(mw, -W, row >= 1), nbr(mw, W, row <= H - 2)))

        # ---- UpsamplingBilinear2d(0.5): one bf16 MXU matmul (batch-block-diag op) ----
        d = jnp.dot(mp.astype(bf16), bd_ref[...], preferred_element_type=f32)   # (C, N*Ld)

        # ---- PreactResBlockBottleneck(ch, ch) ----------------------------------------
        a0 = jnp.maximum(d * s0_ref[...] + t0_ref[...], 0.0)                    # BN0 + ReLU
        h1 = jnp.dot(w1_ref[...], a0.astype(bf16), preferred_element_type=f32)  # 1x1 C->MID
        h1 = jnp.maximum(h1 * s1_ref[...] + t1_ref[...], 0.0)                   # BN1 + ReLU

        # 3x3 conv: 9 shifted/zero-masked copies stacked into scratch -> ONE matmul
        laned = lax.broadcasted_iota(jnp.int32, (MID, NLd), 1)
        cold = laned & (Wd - 1)
        rowd = (laned >> log2wd) & (Hd - 1)
        for ky in range(3):
            for kx in range(3):
                dy, dx = ky - 1, kx - 1
                t = shift_lanes(h1, dy * Wd + dx, 0.0)
                if dx == -1:
                    t = jnp.where(cold >= 1, t, 0.0)
                elif dx == 1:
                    t = jnp.where(cold <= Wd - 2, t, 0.0)
                if dy == -1:
                    t = jnp.where(rowd >= 1, t, 0.0)
                elif dy == 1:
                    t = jnp.where(rowd <= Hd - 2, t, 0.0)
                k0 = (ky * 3 + kx) * MID
                stk_ref[k0:k0 + MID, :] = t                                      # (9*MID, N*Ld)
        c3 = jnp.dot(w3s_ref[...], stk_ref[...].astype(bf16), preferred_element_type=f32)

        h2 = jnp.maximum(c3 * s2_ref[...] + t2_ref[...], 0.0)                    # BN2 + ReLU
        y = d + jnp.dot(w2_ref[...], h2.astype(bf16), preferred_element_type=f32) + b3_ref[...]

        # ---- UpsamplingBilinear2d(2): one bf16 MXU matmul back to (C, N*L) -----------
        o_ref[...] = jnp.dot(y.astype(bf16), bu_ref[...],
                             preferred_element_type=f32).astype(o_ref.dtype)

    return kernel


# ----------------------------------------------------------------------------
# parameters + forward glue
# ----------------------------------------------------------------------------
def init_params(key, ch):
    mid = ch // 4
    ks = jax.random.split(key, 16)

    def rnd(k, shape, s=0.3):
        return (s * jax.random.normal(k, shape)).astype(jnp.float32)

    P = {}
    P['g0'] = (1.0 + rnd(ks[0], (ch,), 0.1)).astype(jnp.float32)
    P['beta0'] = rnd(ks[1], (ch,), 0.1)
    P['m0'] = rnd(ks[2], (ch,), 0.1)
    P['v0'] = (1.0 + jnp.abs(rnd(ks[3], (ch,), 0.2))).astype(jnp.float32)
    P['w1'] = rnd(ks[4], (mid, ch))
    P['g1'] = (1.0 + rnd(ks[5], (mid,), 0.1)).astype(jnp.float32)
    P['beta1'] = rnd(ks[6], (mid,), 0.1)
    P['m1'] = rnd(ks[7], (mid,), 0.1)
    P['v1'] = (1.0 + jnp.abs(rnd(ks[8], (mid,), 0.2))).astype(jnp.float32)
    P['w3'] = rnd(ks[9], (mid, mid, 3, 3))
    P['g2'] = (1.0 + rnd(ks[10], (mid,), 0.1)).astype(jnp.float32)
    P['beta2'] = rnd(ks[11], (mid,), 0.1)
    P['m2'] = rnd(ks[12], (mid,), 0.1)
    P['v2'] = (1.0 + jnp.abs(rnd(ks[13], (mid,), 0.2))).astype(jnp.float32)
    P['w2'] = rnd(ks[14], (ch, mid))
    P['b3'] = rnd(ks[15], (ch,), 0.1)
    return P


def ublock1_forward(x, P):
    N, C, H, W = x.shape
    assert H % 2 == 0 and W % 2 == 0, "scale 0.5 then 2 assumes even H, W"
    assert H & (H - 1) == 0 and W & (W - 1) == 0, "bit-op masks assume power-of-two H, W"
    MID = P['w1'].shape[0]
    Hd, Wd = H // 2, W // 2
    L, Ld = H * W, Hd * Wd
    NL, NLd = N * L, N * Ld

    # per-image Kronecker resize operators, block-diagonal over batch (batch lives in lanes)
    eye = np.eye(N, dtype=np.float32)
    BdT = np.kron(eye, np.kron(bilinear_matrix(H, Hd), bilinear_matrix(W, Wd)).T)   # (N*L, N*Ld)
    BuT = np.kron(eye, np.kron(bilinear_matrix(Hd, H), bilinear_matrix(Wd, W)).T)   # (N*Ld, N*L)
    BdT = jnp.asarray(BdT, jnp.bfloat16)
    BuT = jnp.asarray(BuT, jnp.bfloat16)

    def fold(g, b, m, v):
        s = g / jnp.sqrt(v + BN_EPS)
        return s, b - m * s

    s0, t0 = fold(P['g0'], P['beta0'], P['m0'], P['v0'])
    s1, t1 = fold(P['g1'], P['beta1'], P['m1'], P['v1'])
    s2, t2 = fold(P['g2'], P['beta2'], P['m2'], P['v2'])
    col = lambda v: jnp.asarray(v, jnp.float32).reshape(-1, 1)

    w1 = jnp.asarray(P['w1'], jnp.bfloat16)                                          # (MID, C)
    # (MID, 9*MID): block k = ky*3+kx holds w3[:, :, ky, kx]
    w3s = jnp.transpose(P['w3'], (0, 2, 3, 1)).reshape(MID, 9 * MID).astype(jnp.bfloat16)
    w2 = jnp.asarray(P['w2'], jnp.bfloat16)                                          # (C, MID)

    x2 = jnp.transpose(x, (1, 0, 2, 3)).reshape(C, NL)            # (C, N*H*W), lane-packed batch

    def full(shape):
        return pl.BlockSpec(shape, lambda i, s=shape: (0,) * len(s))

    out = pl.pallas_call(
        make_ublock1_kernel(N, C, MID, H, W),
        out_shape=jax.ShapeDtypeStruct((C, NL), x.dtype),
        grid=(1,),
        in_specs=[
            full((C, NL)),                                        # x (whole batch)
            full((NL, NLd)), full((NLd, NL)),                     # down / up resize ops (bf16)
            full((MID, C)), full((MID, 9 * MID)), full((C, MID)),  # w1, stacked w3, w2 (bf16)
            full((C, 1)), full((C, 1)),                           # folded BN0 scale / bias
            full((MID, 1)), full((MID, 1)),                       # folded BN1
            full((MID, 1)), full((MID, 1)),                       # folded BN2
            full((C, 1)),                                         # conv bias
        ],
        out_specs=full((C, NL)),
        scratch_shapes=[pltpu.VMEM((9 * MID, NLd), jnp.float32)],  # stacked conv taps
        compiler_params=pltpu.CompilerParams(dimension_semantics=("arbitrary",)),
    )(x2, BdT, BuT, w1, w3s, w2,
      col(s0), col(t0), col(s1), col(t1), col(s2), col(t2), col(P['b3']))
    return jnp.transpose(out.reshape(C, N, H, W), (1, 0, 2, 3))


# ----------------------------------------------------------------------------
# pure-numpy (float64) reference of the same math
# ----------------------------------------------------------------------------
def reference_forward(x, P):
    x = np.asarray(x, dtype=np.float64)
    N, C, H, W = x.shape

    xp = np.pad(x, ((0, 0), (0, 0), (1, 1), (1, 1)), constant_values=-np.inf)
    mp = np.max(np.stack([xp[:, :, dy:dy + H, dx:dx + W]
                          for dy in range(3) for dx in range(3)], axis=0), axis=0)

    Ho, Wo = H // 2, W // 2
    Ahd = bilinear_matrix(H, Ho).astype(np.float64)
    Awd = bilinear_matrix(W, Wo).astype(np.float64)
    d = np.einsum('oh,nchw->ncow', Ahd, mp)
    d = np.einsum('pw,ncow->ncop', Awd, d)

    def bc(a):
        return a[None, :, None, None]

    s0 = P['g0'] / np.sqrt(P['v0'] + BN_EPS); t0 = P['beta0'] - P['m0'] * s0
    h = np.maximum(d * bc(s0) + bc(t0), 0.0)
    h = np.einsum('mc,nchw->nmhw', P['w1'], h)
    s1 = P['g1'] / np.sqrt(P['v1'] + BN_EPS); t1 = P['beta1'] - P['m1'] * s1
    h = np.maximum(h * bc(s1) + bc(t1), 0.0)

    H2, W2 = h.shape[2], h.shape[3]
    hp = np.pad(h, ((0, 0), (0, 0), (1, 1), (1, 1)))
    c3 = np.zeros_like(h)
    for dy in range(3):
        for dx in range(3):
            c3 += np.einsum('oi,nihw->nohw', P['w3'][:, :, dy, dx],
                            hp[:, :, dy:dy + H2, dx:dx + W2])
    s2 = P['g2'] / np.sqrt(P['v2'] + BN_EPS); t2 = P['beta2'] - P['m2'] * s2
    h = np.maximum(c3 * bc(s2) + bc(t2), 0.0)
    h = np.einsum('cm,nmhw->nchw', P['w2'], h) + bc(P['b3'])
    y = d + h

    Ahu = bilinear_matrix(H2, H2 * 2).astype(np.float64)
    Awu = bilinear_matrix(W2, W2 * 2).astype(np.float64)
    u = np.einsum('oh,nchw->ncow', Ahu, y)
    u = np.einsum('pw,ncow->ncop', Awu, u)
    return u


if __name__ == "__main__":
    key = jax.random.PRNGKey(0)
    k_x, k_p = jax.random.split(key)

    N, CH, H, W = 2, 8, 16, 16            # ch=8 -> bottleneck width = ch//4 = 2
    x = jax.random.normal(k_x, (N, CH, H, W), dtype=jnp.float32)
    P = init_params(k_p, CH)

    out = jax.jit(lambda inp: ublock1_forward(inp, P))(x)
    out = jax.block_until_ready(out)
    assert out.shape == (N, CH, H, W), out.shape

    ref = reference_forward(np.asarray(x), {k: np.asarray(v, np.float64) for k, v in P.items()})
    # bf16 MXU operands with f32 accumulation -> allow a modest absolute tolerance
    if not np.allclose(np.asarray(out, np.float64), ref, rtol=5e-2, atol=1e-1):
        max_err = float(np.max(np.abs(np.asarray(out, np.float64) - ref)))
        raise AssertionError(f"kernel/reference mismatch, max abs err = {max_err}")

    print("KERNEL_OK")
</pallas_src>

<mosaic_0001>
module attributes {stable_mosaic.version = 11 : i64} {
  func.func @kernel(%arg0: i32, %arg1: memref<8x512xf32, #tpu.memory_space<vmem>>, %arg2: memref<512x128xbf16, #tpu.memory_space<vmem>>, %arg3: memref<128x512xbf16, #tpu.memory_space<vmem>>, %arg4: memref<2x8xbf16, #tpu.memory_space<vmem>>, %arg5: memref<2x18xbf16, #tpu.memory_space<vmem>>, %arg6: memref<8x2xbf16, #tpu.memory_space<vmem>>, %arg7: memref<8x1xf32, #tpu.memory_space<vmem>>, %arg8: memref<8x1xf32, #tpu.memory_space<vmem>>, %arg9: memref<2x1xf32, #tpu.memory_space<vmem>>, %arg10: memref<2x1xf32, #tpu.memory_space<vmem>>, %arg11: memref<2x1xf32, #tpu.memory_space<vmem>>, %arg12: memref<2x1xf32, #tpu.memory_space<vmem>>, %arg13: memref<8x1xf32, #tpu.memory_space<vmem>>, %arg14: memref<8x512xf32, #tpu.memory_space<vmem>>, %arg15: memref<18x128xf32, #tpu.memory_space<vmem>>) attributes {dimension_semantics = [#tpu.dimension_semantics<arbitrary>], iteration_bounds = array<i64: 1>, scalar_prefetch = 0 : i64, scratch_operands = 1 : i64, tpu.core_type = #tpu.core_type<tc>, window_params = [{pipeline_mode = #tpu.pipeline_mode<synchronous>, transform_indices = @transform_0, window_bounds = array<i64: 8, 512>}, {pipeline_mode = #tpu.pipeline_mode<synchronous>, transform_indices = @transform_1, window_bounds = array<i64: 512, 128>}, {pipeline_mode = #tpu.pipeline_mode<synchronous>, transform_indices = @transform_2, window_bounds = array<i64: 128, 512>}, {pipeline_mode = #tpu.pipeline_mode<synchronous>, transform_indices = @transform_3, window_bounds = array<i64: 2, 8>}, {pipeline_mode = #tpu.pipeline_mode<synchronous>, transform_indices = @transform_4, window_bounds = array<i64: 2, 18>}, {pipeline_mode = #tpu.pipeline_mode<synchronous>, transform_indices = @transform_5, window_bounds = array<i64: 8, 2>}, {pipeline_mode = #tpu.pipeline_mode<synchronous>, transform_indices = @transform_6, window_bounds = array<i64: 8, 1>}, {pipeline_mode = #tpu.pipeline_mode<synchronous>, transform_indices = @transform_7, window_bounds = array<i64: 8, 1>}, {pipeline_mode = #tpu.pipeline_mode<synchronous>, transform_indices = @transform_8, window_bounds = array<i64: 2, 1>}, {pipeline_mode = #tpu.pipeline_mode<synchronous>, transform_indices = @transform_9, window_bounds = array<i64: 2, 1>}, {pipeline_mode = #tpu.pipeline_mode<synchronous>, transform_indices = @transform_10, window_bounds = array<i64: 2, 1>}, {pipeline_mode = #tpu.pipeline_mode<synchronous>, transform_indices = @transform_11, window_bounds = array<i64: 2, 1>}, {pipeline_mode = #tpu.pipeline_mode<synchronous>, transform_indices = @transform_12, window_bounds = array<i64: 8, 1>}, {pipeline_mode = #tpu.pipeline_mode<synchronous>, transform_indices = @transform_13, window_bounds = array<i64: 8, 512>}]} {
    %c0 = arith.constant 0 : index
    %c0_0 = arith.constant 0 : index
    %0 = vector.load %arg1[%c0, %c0_0] : memref<8x512xf32, #tpu.memory_space<vmem>>, vector<8x512xf32>
    %1 = tpu.iota {dimensions = array<i32: 1>} : vector<8x512xi32>
    %c15_i32 = arith.constant 15 : i32
    %2 = vector.broadcast %c15_i32 : i32 to vector<8x512xi32>
    %3 = arith.andi %1, %2 : vector<8x512xi32>
    %c4_i32 = arith.constant 4 : i32
    %4 = vector.broadcast %c4_i32 : i32 to vector<8x512xi32>
    %5 = arith.shrsi %1, %4 : vector<8x512xi32>
    %c15_i32_1 = arith.constant 15 : i32
    %6 = vector.broadcast %c15_i32_1 : i32 to vector<8x512xi32>
    %7 = arith.andi %5, %6 : vector<8x512xi32>
    %c1_i32 = arith.constant 1 : i32
    %8 = vector.broadcast %c1_i32 : i32 to vector<8x512xi32>
    %9 = arith.cmpi sge, %3, %8 : vector<8x512xi32>
    %cst = arith.constant 0xFF800000 : f32
    %10 = vector.broadcast %cst : f32 to vector<8x1xf32>
    %11 = vector.extract_strided_slice %0 {offsets = [0, 0], sizes = [8, 511], strides = [1, 1]} : vector<8x512xf32> to vector<8x511xf32>
    %12 = tpu.concatenate %10, %11 in 1 : vector<8x1xf32>, vector<8x511xf32> -> vector<8x512xf32>
    %cst_2 = arith.constant 0xFF800000 : f32
    %13 = vector.broadcast %cst_2 : f32 to vector<8x512xf32>
    %14 = arith.select %9, %12, %13 : vector<8x512xi1>, vector<8x512xf32>
    %c14_i32 = arith.constant 14 : i32
    %15 = vector.broadcast %c14_i32 : i32 to vector<8x512xi32>
    %16 = arith.cmpi sle, %3, %15 : vector<8x512xi32>
    %cst_3 = arith.constant 0xFF800000 : f32
    %17 = vector.broadcast %cst_3 : f32 to vector<8x1xf32>
    %18 = vector.extract_strided_slice %0 {offsets = [0, 1], sizes = [8, 511], strides = [1, 1]} : vector<8x512xf32> to vector<8x511xf32>
    %19 = tpu.concatenate %18, %17 in 1 : vector<8x511xf32>, vector<8x1xf32> -> vector<8x512xf32>
    %cst_4 = arith.constant 0xFF800000 : f32
    %20 = vector.broadcast %cst_4 : f32 to vector<8x512xf32>
    %21 = arith.select %16, %19, %20 : vector<8x512xi1>, vector<8x512xf32>
    %22 = arith.maximumf %14, %21 : vector<8x512xf32>
    %23 = arith.maximumf %0, %22 : vector<8x512xf32>
    %c1_i32_5 = arith.constant 1 : i32
    %24 = vector.broadcast %c1_i32_5 : i32 to vector<8x512xi32>
    %25 = arith.cmpi sge, %7, %24 : vector<8x512xi32>
    %cst_6 = arith.constant 0xFF800000 : f32
    %26 = vector.broadcast %cst_6 : f32 to vector<8x16xf32>
    %27 = vector.extract_strided_slice %23 {offsets = [0, 0], sizes = [8, 496], strides = [1, 1]} : vector<8x512xf32> to vector<8x496xf32>
    %28 = tpu.concatenate %26, %27 in 1 : vector<8x16xf32>, vector<8x496xf32> -> vector<8x512xf32>
    %cst_7 = arith.constant 0xFF800000 : f32
    %29 = vector.broadcast %cst_7 : f32 to vector<8x512xf32>
    %30 = arith.select %25, %28, %29 : vector<8x512xi1>, vector<8x512xf32>
    %c14_i32_8 = arith.constant 14 : i32
    %31 = vector.broadcast %c14_i32_8 : i32 to vector<8x512xi32>
    %32 = arith.cmpi sle, %7, %31 : vector<8x512xi32>
    %cst_9 = arith.constant 0xFF800000 : f32
    %33 = vector.broadcast %cst_9 : f32 to vector<8x16xf32>
    %34 = vector.extract_strided_slice %23 {offsets = [0, 16], sizes = [8, 496], strides = [1, 1]} : vector<8x512xf32> to vector<8x496xf32>
    %35 = tpu.concatenate %34, %33 in 1 : vector<8x496xf32>, vector<8x16xf32> -> vector<8x512xf32>
    %cst_10 = arith.constant 0xFF800000 : f32
    %36 = vector.broadcast %cst_10 : f32 to vector<8x512xf32>
    %37 = arith.select %32, %35, %36 : vector<8x512xi1>, vector<8x512xf32>
    %38 = arith.maximumf %30, %37 : vector<8x512xf32>
    %39 = arith.maximumf %23, %38 : vector<8x512xf32>
    %40 = arith.truncf %39 : vector<8x512xf32> to vector<8x512xbf16>
    %c0_11 = arith.constant 0 : index
    %c0_12 = arith.constant 0 : index
    %41 = vector.load %arg2[%c0_11, %c0_12] : memref<512x128xbf16, #tpu.memory_space<vmem>>, vector<512x128xbf16>
    %cst_13 = arith.constant dense<0.000000e+00> : vector<8x128xf32>
    %42 = tpu.matmul %40, %41, %cst_13 {dimension_numbers = #tpu.dot_dimension_numbers<[1], [0], [0], [1], [0, 0, 1, 1], [], []>} : vector<8x512xbf16>, vector<512x128xbf16>, vector<8x128xf32> -> vector<8x128xf32>
    %c0_14 = arith.constant 0 : index
    %c0_15 = arith.constant 0 : index
    %43 = vector.load %arg7[%c0_14, %c0_15] : memref<8x1xf32, #tpu.memory_space<vmem>>, vector<8x1xf32>
    %44 = vector.broadcast %43 : vector<8x1xf32> to vector<8x128xf32>
    %45 = arith.mulf %42, %44 : vector<8x128xf32>
    %c0_16 = arith.constant 0 : index
    %c0_17 = arith.constant 0 : index
    %46 = vector.load %arg8[%c0_16, %c0_17] : memref<8x1xf32, #tpu.memory_space<vmem>>, vector<8x1xf32>
    %47 = vector.broadcast %46 : vector<8x1xf32> to vector<8x128xf32>
    %48 = arith.addf %45, %47 : vector<8x128xf32>
    %cst_18 = arith.constant 0.000000e+00 : f32
    %49 = vector.broadcast %cst_18 : f32 to vector<8x128xf32>
    %50 = arith.maximumf %48, %49 : vector<8x128xf32>
    %c0_19 = arith.constant 0 : index
    %c0_20 = arith.constant 0 : index
    %51 = vector.load %arg4[%c0_19, %c0_20] : memref<2x8xbf16, #tpu.memory_space<vmem>>, vector<2x8xbf16>
    %52 = arith.truncf %50 : vector<8x128xf32> to vector<8x128xbf16>
    %cst_21 = arith.constant dense<0.000000e+00> : vector<2x128xf32>
    %53 = tpu.matmul %51, %52, %cst_21 {dimension_numbers = #tpu.dot_dimension_numbers<[1], [0], [0], [1], [0, 0, 1, 1], [], []>} : vector<2x8xbf16>, vector<8x128xbf16>, vector<2x128xf32> -> vector<2x128xf32>
    %c0_22 = arith.constant 0 : index
    %c0_23 = arith.constant 0 : index
    %54 = vector.load %arg9[%c0_22, %c0_23] : memref<2x1xf32, #tpu.memory_space<vmem>>, vector<2x1xf32>
    %55 = vector.broadcast %54 : vector<2x1xf32> to vector<2x128xf32>
    %56 = arith.mulf %53, %55 : vector<2x128xf32>
    %c0_24 = arith.constant 0 : index
    %c0_25 = arith.constant 0 : index
    %57 = vector.load %arg10[%c0_24, %c0_25] : memref<2x1xf32, #tpu.memory_space<vmem>>, vector<2x1xf32>
    %58 = vector.broadcast %57 : vector<2x1xf32> to vector<2x128xf32>
    %59 = arith.addf %56, %58 : vector<2x128xf32>
    %cst_26 = arith.constant 0.000000e+00 : f32
    %60 = vector.broadcast %cst_26 : f32 to vector<2x128xf32>
    %61 = arith.maximumf %59, %60 : vector<2x128xf32>
    %62 = tpu.iota {dimensions = array<i32: 1>} : vector<2x128xi32>
    %c7_i32 = arith.constant 7 : i32
    %63 = vector.broadcast %c7_i32 : i32 to vector<2x128xi32>
    %64 = arith.andi %62, %63 : vector<2x128xi32>
    %c3_i32 = arith.constant 3 : i32
    %65 = vector.broadcast %c3_i32 : i32 to vector<2x128xi32>
    %66 = arith.shrsi %62, %65 : vector<2x128xi32>
    %c7_i32_27 = arith.constant 7 : i32
    %67 = vector.broadcast %c7_i32_27 : i32 to vector<2x128xi32>
    %68 = arith.andi %66, %67 : vector<2x128xi32>
    %cst_28 = arith.constant 0.000000e+00 : f32
    %69 = vector.broadcast %cst_28 : f32 to vector<2x9xf32>
    %70 = vector.extract_strided_slice %61 {offsets = [0, 0], sizes = [2, 119], strides = [1, 1]} : vector<2x128xf32> to vector<2x119xf32>
    %71 = tpu.concatenate %69, %70 in 1 : vector<2x9xf32>, vector<2x119xf32> -> vector<2x128xf32>
    %c1_i32_29 = arith.constant 1 : i32
    %72 = vector.broadcast %c1_i32_29 : i32 to vector<2x128xi32>
    %73 = arith.cmpi sge, %64, %72 : vector<2x128xi32>
    %cst_30 = arith.constant 0.000000e+00 : f32
    %74 = vector.broadcast %cst_30 : f32 to vector<2x128xf32>
    %75 = arith.select %73, %71, %74 : vector<2x128xi1>, vector<2x128xf32>
    %c1_i32_31 = arith.constant 1 : i32
    %76 = vector.broadcast %c1_i32_31 : i32 to vector<2x128xi32>
    %77 = arith.cmpi sge, %68, %76 : vector<2x128xi32>
    %cst_32 = arith.constant 0.000000e+00 : f32
    %78 = vector.broadcast %cst_32 : f32 to vector<2x128xf32>
    %79 = arith.select %77, %75, %78 : vector<2x128xi1>, vector<2x128xf32>
    %c0_33 = arith.constant 0 : index
    %c0_34 = arith.constant 0 : index
    %80 = vector.load %arg15[%c0_33, %c0_34] : memref<18x128xf32, #tpu.memory_space<vmem>>, vector<2x128xf32>
    tpu.vector_store %arg15[%c0_33, %c0_34], %79 {strides = array<i32>} : memref<18x128xf32, #tpu.memory_space<vmem>>, vector<2x128xf32>,
    %cst_35 = arith.constant 0.000000e+00 : f32
    %81 = vector.broadcast %cst_35 : f32 to vector<2x8xf32>
    %82 = vector.extract_strided_slice %61 {offsets = [0, 0], sizes = [2, 120], strides = [1, 1]} : vector<2x128xf32> to vector<2x120xf32>
    %83 = tpu.concatenate %81, %82 in 1 : vector<2x8xf32>, vector<2x120xf32> -> vector<2x128xf32>
    %c1_i32_36 = arith.constant 1 : i32
    %84 = vector.broadcast %c1_i32_36 : i32 to vector<2x128xi32>
    %85 = arith.cmpi sge, %68, %84 : vector<2x128xi32>
    %cst_37 = arith.constant 0.000000e+00 : f32
    %86 = vector.broadcast %cst_37 : f32 to vector<2x128xf32>
    %87 = arith.select %85, %83, %86 : vector<2x128xi1>, vector<2x128xf32>
    %c2 = arith.constant 2 : index
    %c0_38 = arith.constant 0 : index
    %88 = vector.load %arg15[%c2, %c0_38] : memref<18x128xf32, #tpu.memory_space<vmem>>, vector<2x128xf32>
    tpu.vector_store %arg15[%c2, %c0_38], %87 {strides = array<i32>} : memref<18x128xf32, #tpu.memory_space<vmem>>, vector<2x128xf32>,
    %cst_39 = arith.constant 0.000000e+00 : f32
    %89 = vector.broadcast %cst_39 : f32 to vector<2x7xf32>
    %90 = vector.extract_strided_slice %61 {offsets = [0, 0], sizes = [2, 121], strides = [1, 1]} : vector<2x128xf32> to vector<2x121xf32>
    %91 = tpu.concatenate %89, %90 in 1 : vector<2x7xf32>, vector<2x121xf32> -> vector<2x128xf32>
    %c6_i32 = arith.constant 6 : i32
    %92 = vector.broadcast %c6_i32 : i32 to vector<2x128xi32>
    %93 = arith.cmpi sle, %64, %92 : vector<2x128xi32>
    %cst_40 = arith.constant 0.000000e+00 : f32
    %94 = vector.broadcast %cst_40 : f32 to vector<2x128xf32>
    %95 = arith.select %93, %91, %94 : vector<2x128xi1>, vector<2x128xf32>
    %c1_i32_41 = arith.constant 1 : i32
    %96 = vector.broadcast %c1_i32_41 : i32 to vector<2x128xi32>
    %97 = arith.cmpi sge, %68, %96 : vector<2x128xi32>
    %cst_42 = arith.constant 0.000000e+00 : f32
    %98 = vector.broadcast %cst_42 : f32 to vector<2x128xf32>
    %99 = arith.select %97, %95, %98 : vector<2x128xi1>, vector<2x128xf32>
    %c4 = arith.constant 4 : index
    %c0_43 = arith.constant 0 : index
    %100 = vector.load %arg15[%c4, %c0_43] : memref<18x128xf32, #tpu.memory_space<vmem>>, vector<2x128xf32>
    tpu.vector_store %arg15[%c4, %c0_43], %99 {strides = array<i32>} : memref<18x128xf32, #tpu.memory_space<vmem>>, vector<2x128xf32>,
    %cst_44 = arith.constant 0.000000e+00 : f32
    %101 = vector.broadcast %cst_44 : f32 to vector<2x1xf32>
    %102 = vector.extract_strided_slice %61 {offsets = [0, 0], sizes = [2, 127], strides = [1, 1]} : vector<2x128xf32> to vector<2x127xf32>
    %103 = tpu.concatenate %101, %102 in 1 : vector<2x1xf32>, vector<2x127xf32> -> vector<2x128xf32>
    %c1_i32_45 = arith.constant 1 : i32
    %104 = vector.broadcast %c1_i32_45 : i32 to vector<2x128xi32>
    %105 = arith.cmpi sge, %64, %104 : vector<2x128xi32>
    %cst_46 = arith.constant 0.000000e+00 : f32
    %106 = vector.broadcast %cst_46 : f32 to vector<2x128xf32>
    %107 = arith.select %105, %103, %106 : vector<2x128xi1>, vector<2x128xf32>
    %c6 = arith.constant 6 : index
    %c0_47 = arith.constant 0 : index
    %108 = vector.load %arg15[%c6, %c0_47] : memref<18x128xf32, #tpu.memory_space<vmem>>, vector<2x128xf32>
    tpu.vector_store %arg15[%c6, %c0_47], %107 {strides = array<i32>} : memref<18x128xf32, #tpu.memory_space<vmem>>, vector<2x128xf32>,
    %c8 = arith.constant 8 : index
    %c0_48 = arith.constant 0 : index
    %109 = vector.load %arg15[%c8, %c0_48] : memref<18x128xf32, #tpu.memory_space<vmem>>, vector<2x128xf32>
    tpu.vector_store %arg15[%c8, %c0_48], %61 {strides = array<i32>} : memref<18x128xf32, #tpu.memory_space<vmem>>, vector<2x128xf32>,
    %cst_49 = arith.constant 0.000000e+00 : f32
    %110 = vector.broadcast %cst_49 : f32 to vector<2x1xf32>
    %111 = vector.extract_strided_slice %61 {offsets = [0, 1], sizes = [2, 127], strides = [1, 1]} : vector<2x128xf32> to vector<2x127xf32>
    %112 = tpu.concatenate %111, %110 in 1 : vector<2x127xf32>, vector<2x1xf32> -> vector<2x128xf32>
    %c6_i32_50 = arith.constant 6 : i32
    %113 = vector.broadcast %c6_i32_50 : i32 to vector<2x128xi32>
    %114 = arith.cmpi sle, %64, %113 : vector<2x128xi32>
    %cst_51 = arith.constant 0.000000e+00 : f32
    %115 = vector.broadcast %cst_51 : f32 to vector<2x128xf32>
    %116 = arith.select %114, %112, %115 : vector<2x128xi1>, vector<2x128xf32>
    %c10 = arith.constant 10 : index
    %c0_52 = arith.constant 0 : index
    %117 = vector.load %arg15[%c10, %c0_52] : memref<18x128xf32, #tpu.memory_space<vmem>>, vector<2x128xf32>
    tpu.vector_store %arg15[%c10, %c0_52], %116 {strides = array<i32>} : memref<18x128xf32, #tpu.memory_space<vmem>>, vector<2x128xf32>,
    %cst_53 = arith.constant 0.000000e+00 : f32
    %118 = vector.broadcast %cst_53 : f32 to vector<2x7xf32>
    %119 = vector.extract_strided_slice %61 {offsets = [0, 7], sizes = [2, 121], strides = [1, 1]} : vector<2x128xf32> to vector<2x121xf32>
    %120 = tpu.concatenate %119, %118 in 1 : vector<2x121xf32>, vector<2x7xf32> -> vector<2x128xf32>
    %c1_i32_54 = arith.constant 1 : i32
    %121 = vector.broadcast %c1_i32_54 : i32 to vector<2x128xi32>
    %122 = arith.cmpi sge, %64, %121 : vector<2x128xi32>
    %cst_55 = arith.constant 0.000000e+00 : f32
    %123 = vector.broadcast %cst_55 : f32 to vector<2x128xf32>
    %124 = arith.select %122, %120, %123 : vector<2x128xi1>, vector<2x128xf32>
    %c6_i32_56 = arith.constant 6 : i32
    %125 = vector.broadcast %c6_i32_56 : i32 to vector<2x128xi32>
    %126 = arith.cmpi sle, %68, %125 : vector<2x128xi32>
    %cst_57 = arith.constant 0.000000e+00 : f32
    %127 = vector.broadcast %cst_57 : f32 to vector<2x128xf32>
    %128 = arith.select %126, %124, %127 : vector<2x128xi1>, vector<2x128xf32>
    %c12 = arith.constant 12 : index
    %c0_58 = arith.constant 0 : index
    %129 = vector.load %arg15[%c12, %c0_58] : memref<18x128xf32, #tpu.memory_space<vmem>>, vector<2x128xf32>
    tpu.vector_store %arg15[%c12, %c0_58], %128 {strides = array<i32>} : memref<18x128xf32, #tpu.memory_space<vmem>>, vector<2x128xf32>,
    %cst_59 = arith.constant 0.000000e+00 : f32
    %130 = vector.broadcast %cst_59 : f32 to vector<2x8xf32>
    %131 = vector.extract_strided_slice %61 {offsets = [0, 8], sizes = [2, 120], strides = [1, 1]} : vector<2x128xf32> to vector<2x120xf32>
    %132 = tpu.concatenate %131, %130 in 1 : vector<2x120xf32>, vector<2x8xf32> -> vector<2x128xf32>
    %c6_i32_60 = arith.constant 6 : i32
    %133 = vector.broadcast %c6_i32_60 : i32 to vector<2x128xi32>
    %134 = arith.cmpi sle, %68, %133 : vector<2x128xi32>
    %cst_61 = arith.constant 0.000000e+00 : f32
    %135 = vector.broadcast %cst_61 : f32 to vector<2x128xf32>
    %136 = arith.select %134, %132, %135 : vector<2x128xi1>, vector<2x128xf32>
    %c14 = arith.constant 14 : index
    %c0_62 = arith.constant 0 : index
    %137 = vector.load %arg15[%c14, %c0_62] : memref<18x128xf32, #tpu.memory_space<vmem>>, vector<2x128xf32>
    tpu.vector_store %arg15[%c14, %c0_62], %136 {strides = array<i32>} : memref<18x128xf32, #tpu.memory_space<vmem>>, vector<2x128xf32>,
    %cst_63 = arith.constant 0.000000e+00 : f32
    %138 = vector.broadcast %cst_63 : f32 to vector<2x9xf32>
    %139 = vector.extract_strided_slice %61 {offsets = [0, 9], sizes = [2, 119], strides = [1, 1]} : vector<2x128xf32> to vector<2x119xf32>
    %140 = tpu.concatenate %139, %138 in 1 : vector<2x119xf32>, vector<2x9xf32> -> vector<2x128xf32>
    %c6_i32_64 = arith.constant 6 : i32
    %141 = vector.broadcast %c6_i32_64 : i32 to vector<2x128xi32>
    %142 = arith.cmpi sle, %64, %141 : vector<2x128xi32>
    %cst_65 = arith.constant 0.000000e+00 : f32
    %143 = vector.broadcast %cst_65 : f32 to vector<2x128xf32>
    %144 = arith.select %142, %140, %143 : vector<2x128xi1>, vector<2x128xf32>
    %c6_i32_66 = arith.constant 6 : i32
    %145 = vector.broadcast %c6_i32_66 : i32 to vector<2x128xi32>
    %146 = arith.cmpi sle, %68, %145 : vector<2x128xi32>
    %cst_67 = arith.constant 0.000000e+00 : f32
    %147 = vector.broadcast %cst_67 : f32 to vector<2x128xf32>
    %148 = arith.select %146, %144, %147 : vector<2x128xi1>, vector<2x128xf32>
    %c16 = arith.constant 16 : index
    %c0_68 = arith.constant 0 : index
    %149 = vector.load %arg15[%c16, %c0_68] : memref<18x128xf32, #tpu.memory_space<vmem>>, vector<2x128xf32>
    tpu.vector_store %arg15[%c16, %c0_68], %148 {strides = array<i32>} : memref<18x128xf32, #tpu.memory_space<vmem>>, vector<2x128xf32>,
    %c0_69 = arith.constant 0 : index
    %c0_70 = arith.constant 0 : index
    %150 = vector.load %arg5[%c0_69, %c0_70] : memref<2x18xbf16, #tpu.memory_space<vmem>>, vector<2x18xbf16>
    %c0_71 = arith.constant 0 : index
    %c0_72 = arith.constant 0 : index
    %151 = vector.load %arg15[%c0_71, %c0_72] : memref<18x128xf32, #tpu.memory_space<vmem>>, vector<18x128xf32>
    %152 = arith.truncf %151 : vector<18x128xf32> to vector<18x128xbf16>
    %cst_73 = arith.constant dense<0.000000e+00> : vector<2x128xf32>
    %153 = tpu.matmul %150, %152, %cst_73 {dimension_numbers = #tpu.dot_dimension_numbers<[1], [0], [0], [1], [0, 0, 1, 1], [], []>} : vector<2x18xbf16>, vector<18x128xbf16>, vector<2x128xf32> -> vector<2x128xf32>
    %c0_74 = arith.constant 0 : index
    %c0_75 = arith.constant 0 : index
    %154 = vector.load %arg11[%c0_74, %c0_75] : memref<2x1xf32, #tpu.memory_space<vmem>>, vector<2x1xf32>
    %155 = vector.broadcast %154 : vector<2x1xf32> to vector<2x128xf32>
    %156 = arith.mulf %153, %155 : vector<2x128xf32>
    %c0_76 = arith.constant 0 : index
    %c0_77 = arith.constant 0 : index
    %157 = vector.load %arg12[%c0_76, %c0_77] : memref<2x1xf32, #tpu.memory_space<vmem>>, vector<2x1xf32>
    %158 = vector.broadcast %157 : vector<2x1xf32> to vector<2x128xf32>
    %159 = arith.addf %156, %158 : vector<2x128xf32>
    %cst_78 = arith.constant 0.000000e+00 : f32
    %160 = vector.broadcast %cst_78 : f32 to vector<2x128xf32>
    %161 = arith.maximumf %159, %160 : vector<2x128xf32>
    %c0_79 = arith.constant 0 : index
    %c0_80 = arith.constant 0 : index
    %162 = vector.load %arg6[%c0_79, %c0_80] : memref<8x2xbf16, #tpu.memory_space<vmem>>, vector<8x2xbf16>
    %163 = arith.truncf %161 : vector<2x128xf32> to vector<2x128xbf16>
    %cst_81 = arith.constant dense<0.000000e+00> : vector<8x128xf32>
    %164 = tpu.matmul %162, %163, %cst_81 {dimension_numbers = #tpu.dot_dimension_numbers<[1], [0], [0], [1], [0, 0, 1, 1], [], []>} : vector<8x2xbf16>, vector<2x128xbf16>, vector<8x128xf32> -> vector<8x128xf32>
    %165 = arith.addf %42, %164 : vector<8x128xf32>
    %c0_82 = arith.constant 0 : index
    %c0_83 = arith.constant 0 : index
    %166 = vector.load %arg13[%c0_82, %c0_83] : memref<8x1xf32, #tpu.memory_space<vmem>>, vector<8x1xf32>
    %167 = vector.broadcast %166 : vector<8x1xf32> to vector<8x128xf32>
    %168 = arith.addf %165, %167 : vector<8x128xf32>
    %169 = arith.truncf %168 : vector<8x128xf32> to vector<8x128xbf16>
    %c0_84 = arith.constant 0 : index
    %c0_85 = arith.constant 0 : index
    %170 = vector.load %arg3[%c0_84, %c0_85] : memref<128x512xbf16, #tpu.memory_space<vmem>>, vector<128x512xbf16>
    %cst_86 = arith.constant dense<0.000000e+00> : vector<8x512xf32>
    %171 = tpu.matmul %169, %170, %cst_86 {dimension_numbers = #tpu.dot_dimension_numbers<[1], [0], [0], [1], [0, 0, 1, 1], [], []>} : vector<8x128xbf16>, vector<128x512xbf16>, vector<8x512xf32> -> vector<8x512xf32>
    %c0_87 = arith.constant 0 : index
    %c0_88 = arith.constant 0 : index
    %172 = vector.load %arg14[%c0_87, %c0_88] : memref<8x512xf32, #tpu.memory_space<vmem>>, vector<8x512xf32>
    tpu.vector_store %arg14[%c0_87, %c0_88], %171 {strides = array<i32>} : memref<8x512xf32, #tpu.memory_space<vmem>>, vector<8x512xf32>,
    return
  }
  func.func @transform_0(%arg0: i32) -> (i32, i32) {
    %c0_i32 = arith.constant 0 : i32
    %c0_i32_0 = arith.constant 0 : i32
    %c0_i32_1 = arith.constant 0 : i32
    return %c0_i32, %c0_i32_0 : i32, i32
  }
  func.func @transform_1(%arg0: i32) -> (i32, i32) {
    %c0_i32 = arith.constant 0 : i32
    %c0_i32_0 = arith.constant 0 : i32
    %c0_i32_1 = arith.constant 0 : i32
    return %c0_i32, %c0_i32_0 : i32, i32
  }
  func.func @transform_2(%arg0: i32) -> (i32, i32) {
    %c0_i32 = arith.constant 0 : i32
    %c0_i32_0 = arith.constant 0 : i32
    %c0_i32_1 = arith.constant 0 : i32
    return %c0_i32, %c0_i32_0 : i32, i32
  }
  func.func @transform_3(%arg0: i32) -> (i32, i32) {
    %c0_i32 = arith.constant 0 : i32
    %c0_i32_0 = arith.constant 0 : i32
    %c0_i32_1 = arith.constant 0 : i32
    return %c0_i32, %c0_i32_0 : i32, i32
  }
  func.func @transform_4(%arg0: i32) -> (i32, i32) {
    %c0_i32 = arith.constant 0 : i32
    %c0_i32_0 = arith.constant 0 : i32
    %c0_i32_1 = arith.constant 0 : i32
    return %c0_i32, %c0_i32_0 : i32, i32
  }
  func.func @transform_5(%arg0: i32) -> (i32, i32) {
    %c0_i32 = arith.constant 0 : i32
    %c0_i32_0 = arith.constant 0 : i32
    %c0_i32_1 = arith.constant 0 : i32
    return %c0_i32, %c0_i32_0 : i32, i32
  }
  func.func @transform_6(%arg0: i32) -> (i32, i32) {
    %c0_i32 = arith.constant 0 : i32
    %c0_i32_0 = arith.constant 0 : i32
    %c0_i32_1 = arith.constant 0 : i32
    return %c0_i32, %c0_i32_0 : i32, i32
  }
  func.func @transform_7(%arg0: i32) -> (i32, i32) {
    %c0_i32 = arith.constant 0 : i32
    %c0_i32_0 = arith.constant 0 : i32
    %c0_i32_1 = arith.constant 0 : i32
    return %c0_i32, %c0_i32_0 : i32, i32
  }
  func.func @transform_8(%arg0: i32) -> (i32, i32) {
    %c0_i32 = arith.constant 0 : i32
    %c0_i32_0 = arith.constant 0 : i32
    %c0_i32_1 = arith.constant 0 : i32
    return %c0_i32, %c0_i32_0 : i32, i32
  }
  func.func @transform_9(%arg0: i32) -> (i32, i32) {
    %c0_i32 = arith.constant 0 : i32
    %c0_i32_0 = arith.constant 0 : i32
    %c0_i32_1 = arith.constant 0 : i32
    return %c0_i32, %c0_i32_0 : i32, i32
  }
  func.func @transform_10(%arg0: i32) -> (i32, i32) {
    %c0_i32 = arith.constant 0 : i32
    %c0_i32_0 = arith.constant 0 : i32
    %c0_i32_1 = arith.constant 0 : i32
    return %c0_i32, %c0_i32_0 : i32, i32
  }
  func.func @transform_11(%arg0: i32) -> (i32, i32) {
    %c0_i32 = arith.constant 0 : i32
    %c0_i32_0 = arith.constant 0 : i32
    %c0_i32_1 = arith.constant 0 : i32
    return %c0_i32, %c0_i32_0 : i32, i32
  }
  func.func @transform_12(%arg0: i32) -> (i32, i32) {
    %c0_i32 = arith.constant 0 : i32
    %c0_i32_0 = arith.constant 0 : i32
    %c0_i32_1 = arith.constant 0 : i32
    return %c0_i32, %c0_i32_0 : i32, i32
  }
  func.func @transform_13(%arg0: i32) -> (i32, i32) {
    %c0_i32 = arith.constant 0 : i32
    %c0_i32_0 = arith.constant 0 : i32
    %c0_i32_1 = arith.constant 0 : i32
    return %c0_i32, %c0_i32_0 : i32, i32
  }
}

</mosaic_0001>

<llo_original>
// kernel: _lambda_.1
$region0: #{_lambda_.1}
  #allocation0 [shape = 'u32[]', space=smem, size = 0x4, offset = 0x4, fixed_abs, tag = 'smem constant byte address 0x4 - core index']
  #allocation1 [shape = 'u32[144,128]{1,0:T(1,128)}', space=vmem, size = 0x12000, scoped, tag = 'internal scratch']
  #allocation2 [shape = 'f32[18,128]{1,0:T(8,128)}', space=vmem, size = 0x3000, scoped, tag = 'scratch operand']
  %s0 = inlined_call_operand.vmem [shape: f32[8,512], index: 0, kind: input, shape index: {}]
  %s1 = inlined_call_operand.vmem [shape: bf16[512,128], index: 1, kind: input, shape index: {}]
  %s2 = inlined_call_operand.vmem [shape: bf16[128,512], index: 2, kind: input, shape index: {}]
  %s3 = inlined_call_operand.vmem [shape: bf16[2,8], index: 3, kind: input, shape index: {}]
  %s4 = inlined_call_operand.vmem [shape: bf16[2,18], index: 4, kind: input, shape index: {}]
  %s5 = inlined_call_operand.vmem [shape: bf16[8,2], index: 5, kind: input, shape index: {}]
  %s6 = inlined_call_operand.vmem [shape: f32[8,1], index: 6, kind: input, shape index: {}]
  %s7 = inlined_call_operand.vmem [shape: f32[8,1], index: 7, kind: input, shape index: {}]
  %s8 = inlined_call_operand.vmem [shape: f32[2,1], index: 8, kind: input, shape index: {}]
  %s9 = inlined_call_operand.vmem [shape: f32[2,1], index: 9, kind: input, shape index: {}]
  %s10 = inlined_call_operand.vmem [shape: f32[2,1], index: 10, kind: input, shape index: {}]
  %s11 = inlined_call_operand.vmem [shape: f32[2,1], index: 11, kind: input, shape index: {}]
  %s12 = inlined_call_operand.vmem [shape: f32[8,1], index: 12, kind: input, shape index: {}]
  %s13 = inlined_call_operand.vmem [shape: f32[8,512], index: 13, kind: output, shape index: {}]
  %s14 = sld [smem:[#allocation0]]
  $region62: #{_lambda_.1} parent=0
    _
  %s16 = ssub.s32 1, %s14
  %s17 = scalar_select 0, %s16, %s14
  // Predicated region
  $region2: #{_lambda_.1} parent=0 // pred_check
    _
  $region3: #{_lambda_.1} parent=0 // pred_check_branch
    %19 = sbr.rel (0) target = $region5
  $region4: #{_lambda_.1} parent=0 // pred_region
    _
  $region5: #{_lambda_.1} parent=0 // pred_fallthru
    _
  // Predicated region
  $region6: #{_lambda_.1} parent=0 // pred_check
    _
  $region7: #{_lambda_.1} parent=0 // pred_check_branch
    %21 = sbr.rel (0) target = $region9
  $region8: #{_lambda_.1} parent=0 // pred_region
    _
  $region9: #{_lambda_.1} parent=0 // pred_fallthru
    _
  // Predicated region
  $region10: #{_lambda_.1} parent=0 // pred_check
    _
  $region11: #{_lambda_.1} parent=0 // pred_check_branch
    %23 = sbr.rel (0) target = $region13
  $region12: #{_lambda_.1} parent=0 // pred_region
    _
  $region13: #{_lambda_.1} parent=0 // pred_fallthru
    _
  // Predicated region
  $region14: #{_lambda_.1} parent=0 // pred_check
    _
  $region15: #{_lambda_.1} parent=0 // pred_check_branch
    %25 = sbr.rel (0) target = $region17
  $region16: #{_lambda_.1} parent=0 // pred_region
    _
  $region17: #{_lambda_.1} parent=0 // pred_fallthru
    _
  // Predicated region
  $region18: #{_lambda_.1} parent=0 // pred_check
    _
  $region19: #{_lambda_.1} parent=0 // pred_check_branch
    %27 = sbr.rel (0) target = $region21
  $region20: #{_lambda_.1} parent=0 // pred_region
    _
  $region21: #{_lambda_.1} parent=0 // pred_fallthru
    _
  // Predicated region
  $region22: #{_lambda_.1} parent=0 // pred_check
    _
  $region23: #{_lambda_.1} parent=0 // pred_check_branch
    %29 = sbr.rel (0) target = $region25
  $region24: #{_lambda_.1} parent=0 // pred_region
    _
  $region25: #{_lambda_.1} parent=0 // pred_fallthru
    _
  // Predicated region
  $region26: #{_lambda_.1} parent=0 // pred_check
    _
  $region27: #{_lambda_.1} parent=0 // pred_check_branch
    %31 = sbr.rel (0) target = $region29
  $region28: #{_lambda_.1} parent=0 // pred_region
    _
  $region29: #{_lambda_.1} parent=0 // pred_fallthru
    _
  // Predicated region
  $region30: #{_lambda_.1} parent=0 // pred_check
    _
  $region31: #{_lambda_.1} parent=0 // pred_check_branch
    %33 = sbr.rel (0) target = $region33
  $region32: #{_lambda_.1} parent=0 // pred_region
    _
  $region33: #{_lambda_.1} parent=0 // pred_fallthru
    _
  // Predicated region
  $region34: #{_lambda_.1} parent=0 // pred_check
    _
  $region35: #{_lambda_.1} parent=0 // pred_check_branch
    %35 = sbr.rel (0) target = $region37
  $region36: #{_lambda_.1} parent=0 // pred_region
    _
  $region37: #{_lambda_.1} parent=0 // pred_fallthru
    _
  // Predicated region
  $region38: #{_lambda_.1} parent=0 // pred_check
    _
  $region39: #{_lambda_.1} parent=0 // pred_check_branch
    %37 = sbr.rel (0) target = $region41
  $region40: #{_lambda_.1} parent=0 // pred_region
    _
  $region41: #{_lambda_.1} parent=0 // pred_fallthru
    _
  // Predicated region
  $region42: #{_lambda_.1} parent=0 // pred_check
    _
  $region43: #{_lambda_.1} parent=0 // pred_check_branch
    %39 = sbr.rel (0) target = $region45
  $region44: #{_lambda_.1} parent=0 // pred_region
    _
  $region45: #{_lambda_.1} parent=0 // pred_fallthru
    _
  // Predicated region
  $region46: #{_lambda_.1} parent=0 // pred_check
    _
  $region47: #{_lambda_.1} parent=0 // pred_check_branch
    %41 = sbr.rel (0) target = $region49
  $region48: #{_lambda_.1} parent=0 // pred_region
    _
  $region49: #{_lambda_.1} parent=0 // pred_fallthru
    _
  // Predicated region
  $region50: #{_lambda_.1} parent=0 // pred_check
    _
  $region51: #{_lambda_.1} parent=0 // pred_check_branch
    %43 = sbr.rel (0) target = $region53
  $region52: #{_lambda_.1} parent=0 // pred_region
    _
  $region53: #{_lambda_.1} parent=0 // pred_fallthru
    _
  %v45 = vld [vmem:[%s0] sm:$0xff]
  %v46 = vld [vmem:[%s0 + $0x8] sm:$0xff]
  %v47 = vld [vmem:[%s0 + $0x10] sm:$0xff]
  %v48 = vld [vmem:[%s0 + $0x18] sm:$0xff]
  %v49 = vlaneseq
  %v50 = vand.u32 %v49, 127
  %v51 = vadd.s32 %v50, 128
  %v52 = vadd.s32 %v50, 256
  %v53 = vadd.s32 %v50, 384
  %v54 = vand.u32 %v50, 15
  %v55 = vand.u32 %v51, 15
  %v56 = vand.u32 %v52, 15
  %v57 = vand.u32 %v53, 15
  %v58 = vshra.s32 %v50, 4
  %v59 = vshra.s32 %v51, 4
  %v60 = vshra.s32 %v52, 4
  %v61 = vshra.s32 %v53, 4
  %v62 = vand.u32 %v58, 15
  %v63 = vand.u32 %v59, 15
  %v64 = vand.u32 %v60, 15
  %v65 = vand.u32 %v61, 15
  %vm66 = vcmp.ge.s32.totalorder %v54, 1
  %vm67 = vcmp.ge.s32.totalorder %v55, 1
  %vm68 = vcmp.ge.s32.totalorder %v56, 1
  %vm69 = vcmp.ge.s32.totalorder %v57, 1
  %74 = vrot.lane.b32.xlu0 %v45, 1
  %v75 = vpop.permute.xlu0 %74
  %76 = vrot.lane.b32.xlu0 %v46, 1
  %v77 = vpop.permute.xlu0 %76
  %78 = vrot.lane.b32.xlu0 %v47, 1
  %v79 = vpop.permute.xlu0 %78
  %80 = vrot.lane.b32.xlu0 %v48, 1
  %v81 = vpop.permute.xlu0 %80
  %vm82 = vcmask 7168
  %v83 = vsel %vm82, %v75, %v77
  %v84 = vsel %vm82, %v77, %v79
  %v85 = vsel %vm82, %v79, %v81
  %v90 = vsel %vm82, -inf, %v75
  %v91 = vsel %vm66, %v90, -inf
  %v92 = vsel %vm67, %v83, -inf
  %v93 = vsel %vm68, %v84, -inf
  %v94 = vsel %vm69, %v85, -inf
  %vm95 = vcmp.le.s32.totalorder %v54, 14
  %vm96 = vcmp.le.s32.totalorder %v55, 14
  %vm97 = vcmp.le.s32.totalorder %v56, 14
  %vm98 = vcmp.le.s32.totalorder %v57, 14
  %99 = vrot.lane.b32.xlu0 %v45, 127
  %v100 = vpop.permute.xlu0 %99
  %101 = vrot.lane.b32.xlu0 %v46, 127
  %v102 = vpop.permute.xlu0 %101
  %103 = vrot.lane.b32.xlu0 %v47, 127
  %v104 = vpop.permute.xlu0 %103
  %105 = vrot.lane.b32.xlu0 %v48, 127
  %v106 = vpop.permute.xlu0 %105
  %vm107 = vcmask 1039360
  %v108 = vsel %vm107, %v100, %v102
  %v109 = vsel %vm107, %v102, %v104
  %v110 = vsel %vm107, %v104, %v106
  %v115 = vsel %vm107, %v106, -inf
  %v116 = vsel %vm95, %v108, -inf
  %v117 = vsel %vm96, %v109, -inf
  %v118 = vsel %vm97, %v110, -inf
  %v119 = vsel %vm98, %v115, -inf
  %v120 = vmax.f32 %v91, %v116
  %v121 = vmax.f32 %v92, %v117
  %v122 = vmax.f32 %v93, %v118
  %v123 = vmax.f32 %v94, %v119
  %v124 = vmax.f32 %v45, %v120
  %v125 = vmax.f32 %v46, %v121
  %v126 = vmax.f32 %v47, %v122
  %v127 = vmax.f32 %v48, %v123
  %vm128 = vcmp.ge.s32.totalorder %v62, 1
  %vm129 = vcmp.ge.s32.totalorder %v63, 1
  %vm130 = vcmp.ge.s32.totalorder %v64, 1
  %vm131 = vcmp.ge.s32.totalorder %v65, 1
  %136 = vrot.lane.b32.xlu0 %v124, 16
  %v137 = vpop.permute.xlu0 %136
  %138 = vrot.lane.b32.xlu0 %v125, 16
  %v139 = vpop.permute.xlu0 %138
  %140 = vrot.lane.b32.xlu0 %v126, 16
  %v141 = vpop.permute.xlu0 %140
  %142 = vrot.lane.b32.xlu0 %v127, 16
  %v143 = vpop.permute.xlu0 %142
  %vm144 = vcmask 130048
  %v145 = vsel %vm144, %v137, %v139
  %v146 = vsel %vm144, %v139, %v141
  %v147 = vsel %vm144, %v141, %v143
  %v152 = vsel %vm144, -inf, %v137
  %v153 = vsel %vm128, %v152, -inf
  %v154 = vsel %vm129, %v145, -inf
  %v155 = vsel %vm130, %v146, -inf
  %v156 = vsel %vm131, %v147, -inf
  %vm157 = vcmp.le.s32.totalorder %v62, 14
  %vm158 = vcmp.le.s32.totalorder %v63, 14
  %vm159 = vcmp.le.s32.totalorder %v64, 14
  %vm160 = vcmp.le.s32.totalorder %v65, 14
  %161 = vrot.lane.b32.xlu0 %v124, 112
  %v162 = vpop.permute.xlu0 %161
  %163 = vrot.lane.b32.xlu0 %v125, 112
  %v164 = vpop.permute.xlu0 %163
  %165 = vrot.lane.b32.xlu0 %v126, 112
  %v166 = vpop.permute.xlu0 %165
  %167 = vrot.lane.b32.xlu0 %v127, 112
  %v168 = vpop.permute.xlu0 %167
  %vm169 = vcmask 916480
  %v170 = vsel %vm169, %v162, %v164
  %v171 = vsel %vm169, %v164, %v166
  %v172 = vsel %vm169, %v166, %v168
  %v177 = vsel %vm169, %v168, -inf
  %v178 = vsel %vm157, %v170, -inf
  %v179 = vsel %vm158, %v171, -inf
  %v180 = vsel %vm159, %v172, -inf
  %v181 = vsel %vm160, %v177, -inf
  %v182 = vmax.f32 %v153, %v178
  %v183 = vmax.f32 %v154, %v179
  %v184 = vmax.f32 %v155, %v180
  %v185 = vmax.f32 %v156, %v181
  %v186 = vmax.f32 %v124, %v182
  %v187 = vmax.f32 %v125, %v183
  %v188 = vmax.f32 %v126, %v184
  %v189 = vmax.f32 %v127, %v185
  %v190 = vpack.c.bf16 %v186, %v186
  %v191 = vpack.c.bf16 %v187, %v187
  %v192 = vpack.c.bf16 %v188, %v188
  %v193 = vpack.c.bf16 %v189, %v189
  %v194 = vld [vmem:[%s1] sm:$0xf]
  %v195 = vld [vmem:[%s1 + $0x4] sm:$0xf]
  %v196 = vld [vmem:[%s1 + $0x8] sm:$0xf]
  %v197 = vld [vmem:[%s1 + $0xc] sm:$0xf]
  %v198 = vld [vmem:[%s1 + $0x10] sm:$0xf]
  %v199 = vld [vmem:[%s1 + $0x14] sm:$0xf]
  %v200 = vld [vmem:[%s1 + $0x18] sm:$0xf]
  %v201 = vld [vmem:[%s1 + $0x1c] sm:$0xf]
  %v202 = vld [vmem:[%s1 + $0x20] sm:$0xf]
  %v203 = vld [vmem:[%s1 + $0x24] sm:$0xf]
  %v204 = vld [vmem:[%s1 + $0x28] sm:$0xf]
  %v205 = vld [vmem:[%s1 + $0x2c] sm:$0xf]
  %v206 = vld [vmem:[%s1 + $0x30] sm:$0xf]
  %v207 = vld [vmem:[%s1 + $0x34] sm:$0xf]
  %v208 = vld [vmem:[%s1 + $0x38] sm:$0xf]
  %v209 = vld [vmem:[%s1 + $0x3c] sm:$0xf]
  %v210 = vld [vmem:[%s1 + $0x40] sm:$0xf]
  %v211 = vld [vmem:[%s1 + $0x44] sm:$0xf]
  %v212 = vld [vmem:[%s1 + $0x48] sm:$0xf]
  %v213 = vld [vmem:[%s1 + $0x4c] sm:$0xf]
  %v214 = vld [vmem:[%s1 + $0x50] sm:$0xf]
  %v215 = vld [vmem:[%s1 + $0x54] sm:$0xf]
  %v216 = vld [vmem:[%s1 + $0x58] sm:$0xf]
  %v217 = vld [vmem:[%s1 + $0x5c] sm:$0xf]
  %v218 = vld [vmem:[%s1 + $0x60] sm:$0xf]
  %v219 = vld [vmem:[%s1 + $0x64] sm:$0xf]
  %v220 = vld [vmem:[%s1 + $0x68] sm:$0xf]
  %v221 = vld [vmem:[%s1 + $0x6c] sm:$0xf]
  %v222 = vld [vmem:[%s1 + $0x70] sm:$0xf]
  %v223 = vld [vmem:[%s1 + $0x74] sm:$0xf]
  %v224 = vld [vmem:[%s1 + $0x78] sm:$0xf]
  %v225 = vld [vmem:[%s1 + $0x7c] sm:$0xf]
  %v226 = vld [vmem:[%s1 + $0x80] sm:$0xf]
  %v227 = vld [vmem:[%s1 + $0x84] sm:$0xf]
  %v228 = vld [vmem:[%s1 + $0x88] sm:$0xf]
  %v229 = vld [vmem:[%s1 + $0x8c] sm:$0xf]
  %v230 = vld [vmem:[%s1 + $0x90] sm:$0xf]
  %v231 = vld [vmem:[%s1 + $0x94] sm:$0xf]
  %v232 = vld [vmem:[%s1 + $0x98] sm:$0xf]
  %v233 = vld [vmem:[%s1 + $0x9c] sm:$0xf]
  %v234 = vld [vmem:[%s1 + $0xa0] sm:$0xf]
  %v235 = vld [vmem:[%s1 + $0xa4] sm:$0xf]
  %v236 = vld [vmem:[%s1 + $0xa8] sm:$0xf]
  %v237 = vld [vmem:[%s1 + $0xac] sm:$0xf]
  %v238 = vld [vmem:[%s1 + $0xb0] sm:$0xf]
  %v239 = vld [vmem:[%s1 + $0xb4] sm:$0xf]
  %v240 = vld [vmem:[%s1 + $0xb8] sm:$0xf]
  %v241 = vld [vmem:[%s1 + $0xbc] sm:$0xf]
  %v242 = vld [vmem:[%s1 + $0xc0] sm:$0xf]
  %v243 = vld [vmem:[%s1 + $0xc4] sm:$0xf]
  %v244 = vld [vmem:[%s1 + $0xc8] sm:$0xf]
  %v245 = vld [vmem:[%s1 + $0xcc] sm:$0xf]
  %v246 = vld [vmem:[%s1 + $0xd0] sm:$0xf]
  %v247 = vld [vmem:[%s1 + $0xd4] sm:$0xf]
  %v248 = vld [vmem:[%s1 + $0xd8] sm:$0xf]
  %v249 = vld [vmem:[%s1 + $0xdc] sm:$0xf]
  %v250 = vld [vmem:[%s1 + $0xe0] sm:$0xf]
  %v251 = vld [vmem:[%s1 + $0xe4] sm:$0xf]
  %v252 = vld [vmem:[%s1 + $0xe8] sm:$0xf]
  %v253 = vld [vmem:[%s1 + $0xec] sm:$0xf]
  %v254 = vld [vmem:[%s1 + $0xf0] sm:$0xf]
  %v255 = vld [vmem:[%s1 + $0xf4] sm:$0xf]
  %v256 = vld [vmem:[%s1 + $0xf8] sm:$0xf]
  %v257 = vld [vmem:[%s1 + $0xfc] sm:$0xf]
  %v322 = vunpack.c.l.b16 %v194
  %v323 = vunpack.c.l.b16 %v195
  %v324 = vunpack.c.l.b16 %v196
  %v325 = vunpack.c.l.b16 %v197
  %v326 = vunpack.c.l.b16 %v198
  %v327 = vunpack.c.l.b16 %v199
  %v328 = vunpack.c.l.b16 %v200
  %v329 = vunpack.c.l.b16 %v201
  %v330 = vunpack.c.l.b16 %v202
  %v331 = vunpack.c.l.b16 %v203
  %v332 = vunpack.c.l.b16 %v204
  %v333 = vunpack.c.l.b16 %v205
  %v334 = vunpack.c.l.b16 %v206
  %v335 = vunpack.c.l.b16 %v207
  %v336 = vunpack.c.l.b16 %v208
  %v337 = vunpack.c.l.b16 %v209
  %v338 = vunpack.c.l.b16 %v210
  %v339 = vunpack.c.l.b16 %v211
  %v340 = vunpack.c.l.b16 %v212
  %v341 = vunpack.c.l.b16 %v213
  %v342 = vunpack.c.l.b16 %v214
  %v343 = vunpack.c.l.b16 %v215
  %v344 = vunpack.c.l.b16 %v216
  %v345 = vunpack.c.l.b16 %v217
  %v346 = vunpack.c.l.b16 %v218
  %v347 = vunpack.c.l.b16 %v219
  %v348 = vunpack.c.l.b16 %v220
  %v349 = vunpack.c.l.b16 %v221
  %v350 = vunpack.c.l.b16 %v222
  %v351 = vunpack.c.l.b16 %v223
  %v352 = vunpack.c.l.b16 %v224
  %v353 = vunpack.c.l.b16 %v225
  %v354 = vunpack.c.l.b16 %v226
  %v355 = vunpack.c.l.b16 %v227
  %v356 = vunpack.c.l.b16 %v228
  %v357 = vunpack.c.l.b16 %v229
  %v358 = vunpack.c.l.b16 %v230
  %v359 = vunpack.c.l.b16 %v231
  %v360 = vunpack.c.l.b16 %v232
  %v361 = vunpack.c.l.b16 %v233
  %v362 = vunpack.c.l.b16 %v234
  %v363 = vunpack.c.l.b16 %v235
  %v364 = vunpack.c.l.b16 %v236
  %v365 = vunpack.c.l.b16 %v237
  %v366 = vunpack.c.l.b16 %v238
  %v367 = vunpack.c.l.b16 %v239
  %v368 = vunpack.c.l.b16 %v240
  %v369 = vunpack.c.l.b16 %v241
  %v370 = vunpack.c.l.b16 %v242
  %v371 = vunpack.c.l.b16 %v243
  %v372 = vunpack.c.l.b16 %v244
  %v373 = vunpack.c.l.b16 %v245
  %v374 = vunpack.c.l.b16 %v246
  %v375 = vunpack.c.l.b16 %v247
  %v376 = vunpack.c.l.b16 %v248
  %v377 = vunpack.c.l.b16 %v249
  %v378 = vunpack.c.l.b16 %v250
  %v379 = vunpack.c.l.b16 %v251
  %v380 = vunpack.c.l.b16 %v252
  %v381 = vunpack.c.l.b16 %v253
  %v382 = vunpack.c.l.b16 %v254
  %v383 = vunpack.c.l.b16 %v255
  %v384 = vunpack.c.l.b16 %v256
  %v385 = vunpack.c.l.b16 %v257
  %v386 = vpack.c.b16 %v323, %v322
  %v387 = vpack.c.b16 %v325, %v324
  %v388 = vpack.c.b16 %v327, %v326
  %v389 = vpack.c.b16 %v329, %v328
  %v390 = vpack.c.b16 %v331, %v330
  %v391 = vpack.c.b16 %v333, %v332
  %v392 = vpack.c.b16 %v335, %v334
  %v393 = vpack.c.b16 %v337, %v336
  %v394 = vpack.c.b16 %v339, %v338
  %v395 = vpack.c.b16 %v341, %v340
  %v396 = vpack.c.b16 %v343, %v342
  %v397 = vpack.c.b16 %v345, %v344
  %v398 = vpack.c.b16 %v347, %v346
  %v399 = vpack.c.b16 %v349, %v348
  %v400 = vpack.c.b16 %v351, %v350
  %v401 = vpack.c.b16 %v353, %v352
  %v402 = vpack.c.b16 %v355, %v354
  %v403 = vpack.c.b16 %v357, %v356
  %v404 = vpack.c.b16 %v359, %v358
  %v405 = vpack.c.b16 %v361, %v360
  %v406 = vpack.c.b16 %v363, %v362
  %v407 = vpack.c.b16 %v365, %v364
  %v408 = vpack.c.b16 %v367, %v366
  %v409 = vpack.c.b16 %v369, %v368
  %v410 = vpack.c.b16 %v371, %v370
  %v411 = vpack.c.b16 %v373, %v372
  %v412 = vpack.c.b16 %v375, %v374
  %v413 = vpack.c.b16 %v377, %v376
  %v414 = vpack.c.b16 %v379, %v378
  %v415 = vpack.c.b16 %v381, %v380
  %v416 = vpack.c.b16 %v383, %v382
  %v417 = vpack.c.b16 %v385, %v384
  %450 = vmatprep.subr.bf16.mxu0 0
  %451 = vmatpush1.bf16.msra.mxu0 %v386
  %452 = vmatprep.subr.bf16.mxu0 0
  %453 = vmatpush1.bf16.msra.mxu0 %v387
  %454 = vmatprep.subr.bf16.mxu0 0
  %455 = vmatpush1.bf16.msra.mxu0 %v388
  %456 = vmatprep.subr.bf16.mxu0 0
  %457 = vmatpush1.bf16.msra.mxu0 %v389
  %458 = vmatprep.subr.bf16.mxu0 0
  %459 = vmatpush1.bf16.msra.mxu0 %v390
  %460 = vmatprep.subr.bf16.mxu0 0
  %461 = vmatpush1.bf16.msra.mxu0 %v391
  %462 = vmatprep.subr.bf16.mxu0 0
  %463 = vmatpush1.bf16.msra.mxu0 %v392
  %464 = vmatprep.subr.bf16.mxu0 0
  %465 = vmatpush1.bf16.msra.mxu0 %v393
  %466 = vmatprep.subr.bf16.mxu0 0
  %467 = vmatpush1.bf16.msra.mxu0 %v394
  %468 = vmatprep.subr.bf16.mxu0 0
  %469 = vmatpush1.bf16.msra.mxu0 %v395
  %470 = vmatprep.subr.bf16.mxu0 0
  %471 = vmatpush1.bf16.msra.mxu0 %v396
  %472 = vmatprep.subr.bf16.mxu0 0
  %473 = vmatpush1.bf16.msra.mxu0 %v397
  %474 = vmatprep.subr.bf16.mxu0 0
  %475 = vmatpush1.bf16.msra.mxu0 %v398
  %476 = vmatprep.subr.bf16.mxu0 0
  %477 = vmatpush1.bf16.msra.mxu0 %v399
  %478 = vmatprep.subr.bf16.mxu0 0
  %479 = vmatpush1.bf16.msra.mxu0 %v400
  %480 = vmatprep.subr.bf16.mxu0 0
  %481 = vmatpush1.bf16.msra.mxu0 %v401
  %482 = vmatprep.mubr.bf16.mxu0 %v191
  %483 = vmatmul.mubr.bf16.gmra.mrb[0].mxu0 %v190
  %v484 = vpop.f32.mrb[0].mxu0
  %v485 = vadd.f32 0.0, %v484
  %v486 = vpop.f32.mrb[0].mxu0
  %v487 = vpop.f32.mrb[0].mxu0
  %v488 = vpop.f32.mrb[0].mxu0
  %489 = vdwg.mxu0
  %490 = vmatprep.subr.bf16.mxu0 0
  %491 = vmatpush1.bf16.msra.mxu0 %v402
  %492 = vmatprep.subr.bf16.mxu0 0
  %493 = vmatpush1.bf16.msra.mxu0 %v403
  %494 = vmatprep.subr.bf16.mxu0 0
  %495 = vmatpush1.bf16.msra.mxu0 %v404
  %496 = vmatprep.subr.bf16.mxu0 0
  %497 = vmatpush1.bf16.msra.mxu0 %v405
  %498 = vmatprep.subr.bf16.mxu0 0
  %499 = vmatpush1.bf16.msra.mxu0 %v406
  %500 = vmatprep.subr.bf16.mxu0 0
  %501 = vmatpush1.bf16.msra.mxu0 %v407
  %502 = vmatprep.subr.bf16.mxu0 0
  %503 = vmatpush1.bf16.msra.mxu0 %v408
  %504 = vmatprep.subr.bf16.mxu0 0
  %505 = vmatpush1.bf16.msra.mxu0 %v409
  %506 = vmatprep.subr.bf16.mxu0 0
  %507 = vmatpush1.bf16.msra.mxu0 %v410
  %508 = vmatprep.subr.bf16.mxu0 0
  %509 = vmatpush1.bf16.msra.mxu0 %v411
  %510 = vmatprep.subr.bf16.mxu0 0
  %511 = vmatpush1.bf16.msra.mxu0 %v412
  %512 = vmatprep.subr.bf16.mxu0 0
  %513 = vmatpush1.bf16.msra.mxu0 %v413
  %514 = vmatprep.subr.bf16.mxu0 0
  %515 = vmatpush1.bf16.msra.mxu0 %v414
  %516 = vmatprep.subr.bf16.mxu0 0
  %517 = vmatpush1.bf16.msra.mxu0 %v415
  %518 = vmatprep.subr.bf16.mxu0 0
  %519 = vmatpush1.bf16.msra.mxu0 %v416
  %520 = vmatprep.subr.bf16.mxu0 0
  %521 = vmatpush1.bf16.msra.mxu0 %v417
  %522 = vmatprep.mubr.bf16.mxu0 %v193
  %523 = vmatmul.mubr.bf16.gmra.mrb[0].mxu0 %v192
  %v524 = vpop.f32.mrb[0].mxu0
  %v525 = vadd.f32 %v485, %v524
  %v526 = vpop.f32.mrb[0].mxu0
  %v527 = vpop.f32.mrb[0].mxu0
  %v528 = vpop.f32.mrb[0].mxu0
  %529 = vdwg.mxu0
  %v530 = vld [vmem:[%s6] sm:$0xff]
  %532 = vset.pattern.permute.xlu0 0
  %533 = vperm.xlu0 %532, %v530
  %v534 = vpop.permute.xlu0 %533
  %v536 = vmul.f32 %v525, %v534
  %v537 = vld [vmem:[%s7] sm:$0xff]
  %539 = vset.pattern.permute.xlu0 0
  %540 = vperm.xlu0 %539, %v537
  %v541 = vpop.permute.xlu0 %540
  %v543 = vadd.f32 %v536, %v541
  %v544 = vmax.f32 %v543, 0.0
  %v545 = vld [vmem:[%s3] sm:$0x1]
  %v546 = vpack.c.bf16 %v544, %v544
  %vm547 = vcmask 64512
  %v549 = vsel %vm547, %v545, 0
  %vm551 = vcmask 1043456
  %v553 = vsel %vm551, %v546, 0
  %555 = vmatprep.subr.bf16.mxu0 0
  %556 = vmatpush1.bf16.msra.mxu0 %v553
  %557 = vmatprep.subr.bf16.mxu0 0
  %558 = vmatpush1.bf16.msra.mxu0 0
  %559 = vmatprep.subr.bf16.mxu0 0
  %560 = vmatpush1.bf16.msra.mxu0 0
  %561 = vmatprep.subr.bf16.mxu0 0
  %562 = vmatpush1.bf16.msra.mxu0 0
  %563 = vmatprep.subr.bf16.mxu0 0
  %564 = vmatpush1.bf16.msra.mxu0 0
  %565 = vmatprep.subr.bf16.mxu0 0
  %566 = vmatpush1.bf16.msra.mxu0 0
  %567 = vmatprep.subr.bf16.mxu0 0
  %568 = vmatpush1.bf16.msra.mxu0 0
  %569 = vmatprep.subr.bf16.mxu0 0
  %570 = vmatpush1.bf16.msra.mxu0 0
  %571 = vmatprep.subr.bf16.mxu0 0
  %572 = vmatpush1.bf16.msra.mxu0 0
  %573 = vmatprep.subr.bf16.mxu0 0
  %574 = vmatpush1.bf16.msra.mxu0 0
  %575 = vmatprep.subr.bf16.mxu0 0
  %576 = vmatpush1.bf16.msra.mxu0 0
  %577 = vmatprep.subr.bf16.mxu0 0
  %578 = vmatpush1.bf16.msra.mxu0 0
  %579 = vmatprep.subr.bf16.mxu0 0
  %580 = vmatpush1.bf16.msra.mxu0 0
  %581 = vmatprep.subr.bf16.mxu0 0
  %582 = vmatpush1.bf16.msra.mxu0 0
  %583 = vmatprep.subr.bf16.mxu0 0
  %584 = vmatpush1.bf16.msra.mxu0 0
  %585 = vmatprep.subr.bf16.mxu0 0
  %586 = vmatpush1.bf16.msra.mxu0 0
  %587 = vmatprep.mubr.bf16.mxu0 0
  %588 = vmatmul.mubr.bf16.gmra.mrb[0].mxu0 %v549
  %v589 = vpop.f32.mrb[0].mxu0
  %v590 = vadd.f32 0.0, %v589
  %v591 = vpop.f32.mrb[0].mxu0
  %v592 = vpop.f32.mrb[0].mxu0
  %v593 = vpop.f32.mrb[0].mxu0
  %594 = vdwg.mxu0
  %v595 = vld [vmem:[%s8] sm:$0x3]
  %597 = vset.pattern.permute.xlu0 0
  %598 = vperm.xlu0 %597, %v595
  %v599 = vpop.permute.xlu0 %598
  %v601 = vmul.f32 %v590, %v599
  %v602 = vld [vmem:[%s9] sm:$0x3]
  %604 = vset.pattern.permute.xlu0 0
  %605 = vperm.xlu0 %604, %v602
  %v606 = vpop.permute.xlu0 %605
  %v608 = vadd.f32 %v601, %v606
  %v609 = vmax.f32 %v608, 0.0
  %v610 = vand.u32 %v50, 7
  %v611 = vshra.s32 %v50, 3
  %v612 = vand.u32 %v611, 7
  %614 = vrot.lane.b32.xlu0 %v609, 9
  %v615 = vpop.permute.xlu0 %614
  %vm617 = vcmask 72704
  %v618 = vsel %vm617, 0.0, %v615
  %vm619 = vcmp.ge.s32.totalorder %v610, 1
  %v620 = vsel %vm619, %v618, 0.0
  %vm621 = vcmp.ge.s32.totalorder %v612, 1
  %v622 = vsel %vm621, %v620, 0.0
  %623 = vst [vmem:[#allocation2] sm:$0x3] %v622
  %624 = vrot.lane.b32.xlu0 %v609, 8
  %v625 = vpop.permute.xlu0 %624
  %v627 = vsel %vm547, 0.0, %v625
  %v628 = vsel %vm621, %v627, 0.0
  %629 = vst [vmem:[#allocation2 + $0x2] sm:$0x3] %v628
  %630 = vrot.lane.b32.xlu0 %v609, 7
  %v631 = vpop.permute.xlu0 %630
  %vm633 = vcmask 56320
  %v634 = vsel %vm633, 0.0, %v631
  %vm635 = vcmp.le.s32.totalorder %v610, 6
  %v636 = vsel %vm635, %v634, 0.0
  %v637 = vsel %vm621, %v636, 0.0
  %638 = vst [vmem:[#allocation2 + $0x4] sm:$0x3] %v637
  %639 = vrot.lane.b32.xlu0 %v609, 1
  %v640 = vpop.permute.xlu0 %639
  %v642 = vsel %vm82, 0.0, %v640
  %v643 = vsel %vm619, %v642, 0.0
  %644 = vst [vmem:[#allocation2 + $0x6] sm:$0x3] %v643
  %645 = vst [vmem:[#allocation2 + $0x8] sm:$0x3] %v609
  %646 = vrot.lane.b32.xlu0 %v609, 127
  %v647 = vpop.permute.xlu0 %646
  %v649 = vsel %vm107, %v647, 0.0
  %v650 = vsel %vm635, %v649, 0.0
  %651 = vst [vmem:[#allocation2 + $0xa] sm:$0x3] %v650
  %652 = vrot.lane.b32.xlu0 %v609, 121
  %v653 = vpop.permute.xlu0 %652
  %vm655 = vcmask 990208
  %v656 = vsel %vm655, %v653, 0.0
  %v657 = vsel %vm619, %v656, 0.0
  %vm658 = vcmp.le.s32.totalorder %v612, 6
  %v659 = vsel %vm658, %v657, 0.0
  %660 = vst [vmem:[#allocation2 + $0xc] sm:$0x3] %v659
  %661 = vrot.lane.b32.xlu0 %v609, 120
  %v662 = vpop.permute.xlu0 %661
  %vm664 = vcmask 982016
  %v665 = vsel %vm664, %v662, 0.0
  %v666 = vsel %vm658, %v665, 0.0
  %667 = vst [vmem:[#allocation2 + $0xe] sm:$0x3] %v666
  %668 = vrot.lane.b32.xlu0 %v609, 119
  %v669 = vpop.permute.xlu0 %668
  %vm671 = vcmask 973824
  %v672 = vsel %vm671, %v669, 0.0
  %v673 = vsel %vm635, %v672, 0.0
  %v674 = vsel %vm658, %v673, 0.0
  %675 = vst [vmem:[#allocation2 + $0x10] sm:$0x3] %v674
  %v676 = vld [vmem:[%s4] sm:$0x1]
  %v677 = vld [vmem:[#allocation2] sm:$0xff]
  %v678 = vld [vmem:[#allocation2 + $0x8] sm:$0xff]
  %v679 = vld [vmem:[#allocation2 + $0x10] sm:$0x3]
  %v680 = vpack.c.bf16 %v678, %v677
  %v681 = vpack.c.bf16 %v679, %v679
  %vm682 = vcmask 146432
  %v684 = vsel %vm682, %v676, 0
  %vm686 = vcmask 1040384
  %v688 = vsel %vm686, %v681, 0
  %690 = vmatprep.subr.bf16.mxu0 0
  %691 = vmatpush1.bf16.msra.mxu0 %v680
  %692 = vmatprep.subr.bf16.mxu0 0
  %693 = vmatpush1.bf16.msra.mxu0 %v688
  %694 = vmatprep.subr.bf16.mxu0 0
  %695 = vmatpush1.bf16.msra.mxu0 0
  %696 = vmatprep.subr.bf16.mxu0 0
  %697 = vmatpush1.bf16.msra.mxu0 0
  %698 = vmatprep.subr.bf16.mxu0 0
  %699 = vmatpush1.bf16.msra.mxu0 0
  %700 = vmatprep.subr.bf16.mxu0 0
  %701 = vmatpush1.bf16.msra.mxu0 0
  %702 = vmatprep.subr.bf16.mxu0 0
  %703 = vmatpush1.bf16.msra.mxu0 0
  %704 = vmatprep.subr.bf16.mxu0 0
  %705 = vmatpush1.bf16.msra.mxu0 0
  %706 = vmatprep.subr.bf16.mxu0 0
  %707 = vmatpush1.bf16.msra.mxu0 0
  %708 = vmatprep.subr.bf16.mxu0 0
  %709 = vmatpush1.bf16.msra.mxu0 0
  %710 = vmatprep.subr.bf16.mxu0 0
  %711 = vmatpush1.bf16.msra.mxu0 0
  %712 = vmatprep.subr.bf16.mxu0 0
  %713 = vmatpush1.bf16.msra.mxu0 0
  %714 = vmatprep.subr.bf16.mxu0 0
  %715 = vmatpush1.bf16.msra.mxu0 0
  %716 = vmatprep.subr.bf16.mxu0 0
  %717 = vmatpush1.bf16.msra.mxu0 0
  %718 = vmatprep.subr.bf16.mxu0 0
  %719 = vmatpush1.bf16.msra.mxu0 0
  %720 = vmatprep.subr.bf16.mxu0 0
  %721 = vmatpush1.bf16.msra.mxu0 0
  %722 = vmatprep.mubr.bf16.mxu0 0
  %723 = vmatmul.mubr.bf16.gmra.mrb[0].mxu0 %v684
  %v724 = vpop.f32.mrb[0].mxu0
  %v725 = vadd.f32 0.0, %v724
  %v726 = vpop.f32.mrb[0].mxu0
  %v727 = vpop.f32.mrb[0].mxu0
  %v728 = vpop.f32.mrb[0].mxu0
  %729 = vdwg.mxu0
  %v730 = vld [vmem:[%s10] sm:$0x3]
  %732 = vset.pattern.permute.xlu0 0
  %733 = vperm.xlu0 %732, %v730
  %v734 = vpop.permute.xlu0 %733
  %v736 = vmul.f32 %v725, %v734
  %v737 = vld [vmem:[%s11] sm:$0x3]
  %739 = vset.pattern.permute.xlu0 0
  %740 = vperm.xlu0 %739, %v737
  %v741 = vpop.permute.xlu0 %740
  %v743 = vadd.f32 %v736, %v741
  %v744 = vmax.f32 %v743, 0.0
  %v745 = vld [vmem:[%s5] sm:$0xf]
  %v746 = vpack.c.bf16 %v744, %v744
  %vm747 = vcmask 15360
  %v749 = vsel %vm747, %v745, 0
  %v752 = vsel %vm686, %v746, 0
  %754 = vmatprep.subr.bf16.mxu0 0
  %755 = vmatpush1.bf16.msra.mxu0 %v752
  %756 = vmatprep.subr.bf16.mxu0 0
  %757 = vmatpush1.bf16.msra.mxu0 0
  %758 = vmatprep.subr.bf16.mxu0 0
  %759 = vmatpush1.bf16.msra.mxu0 0
  %760 = vmatprep.subr.bf16.mxu0 0
  %761 = vmatpush1.bf16.msra.mxu0 0
  %762 = vmatprep.subr.bf16.mxu0 0
  %763 = vmatpush1.bf16.msra.mxu0 0
  %764 = vmatprep.subr.bf16.mxu0 0
  %765 = vmatpush1.bf16.msra.mxu0 0
  %766 = vmatprep.subr.bf16.mxu0 0
  %767 = vmatpush1.bf16.msra.mxu0 0
  %768 = vmatprep.subr.bf16.mxu0 0
  %769 = vmatpush1.bf16.msra.mxu0 0
  %770 = vmatprep.subr.bf16.mxu0 0
  %771 = vmatpush1.bf16.msra.mxu0 0
  %772 = vmatprep.subr.bf16.mxu0 0
  %773 = vmatpush1.bf16.msra.mxu0 0
  %774 = vmatprep.subr.bf16.mxu0 0
  %775 = vmatpush1.bf16.msra.mxu0 0
  %776 = vmatprep.subr.bf16.mxu0 0
  %777 = vmatpush1.bf16.msra.mxu0 0
  %778 = vmatprep.subr.bf16.mxu0 0
  %779 = vmatpush1.bf16.msra.mxu0 0
  %780 = vmatprep.subr.bf16.mxu0 0
  %781 = vmatpush1.bf16.msra.mxu0 0
  %782 = vmatprep.subr.bf16.mxu0 0
  %783 = vmatpush1.bf16.msra.mxu0 0
  %784 = vmatprep.subr.bf16.mxu0 0
  %785 = vmatpush1.bf16.msra.mxu0 0
  %786 = vmatprep.mubr.bf16.mxu0 0
  %787 = vmatmul.mubr.bf16.gmra.mrb[0].mxu0 %v749
  %v788 = vpop.f32.mrb[0].mxu0
  %v789 = vadd.f32 0.0, %v788
  %v790 = vpop.f32.mrb[0].mxu0
  %v791 = vpop.f32.mrb[0].mxu0
  %v792 = vpop.f32.mrb[0].mxu0
  %793 = vdwg.mxu0
  %v794 = vadd.f32 %v525, %v789
  %v795 = vld [vmem:[%s12] sm:$0xff]
  %797 = vset.pattern.permute.xlu0 0
  %798 = vperm.xlu0 %797, %v795
  %v799 = vpop.permute.xlu0 %798
  %v801 = vadd.f32 %v794, %v799
  %v802 = vpack.c.bf16 %v801, %v801
  %v803 = vld [vmem:[%s2] sm:$0xff]
  %v804 = vld [vmem:[%s2 + $0x8] sm:$0xff]
  %v805 = vld [vmem:[%s2 + $0x10] sm:$0xff]
  %v806 = vld [vmem:[%s2 + $0x18] sm:$0xff]
  %v807 = vld [vmem:[%s2 + $0x20] sm:$0xff]
  %v808 = vld [vmem:[%s2 + $0x28] sm:$0xff]
  %v809 = vld [vmem:[%s2 + $0x30] sm:$0xff]
  %v810 = vld [vmem:[%s2 + $0x38] sm:$0xff]
  %v811 = vld [vmem:[%s2 + $0x40] sm:$0xff]
  %v812 = vld [vmem:[%s2 + $0x48] sm:$0xff]
  %v813 = vld [vmem:[%s2 + $0x50] sm:$0xff]
  %v814 = vld [vmem:[%s2 + $0x58] sm:$0xff]
  %v815 = vld [vmem:[%s2 + $0x60] sm:$0xff]
  %v816 = vld [vmem:[%s2 + $0x68] sm:$0xff]
  %v817 = vld [vmem:[%s2 + $0x70] sm:$0xff]
  %v818 = vld [vmem:[%s2 + $0x78] sm:$0xff]
  %v819 = vld [vmem:[%s2 + $0x80] sm:$0xff]
  %v820 = vld [vmem:[%s2 + $0x88] sm:$0xff]
  %v821 = vld [vmem:[%s2 + $0x90] sm:$0xff]
  %v822 = vld [vmem:[%s2 + $0x98] sm:$0xff]
  %v823 = vld [vmem:[%s2 + $0xa0] sm:$0xff]
  %v824 = vld [vmem:[%s2 + $0xa8] sm:$0xff]
  %v825 = vld [vmem:[%s2 + $0xb0] sm:$0xff]
  %v826 = vld [vmem:[%s2 + $0xb8] sm:$0xff]
  %v827 = vld [vmem:[%s2 + $0xc0] sm:$0xff]
  %v828 = vld [vmem:[%s2 + $0xc8] sm:$0xff]
  %v829 = vld [vmem:[%s2 + $0xd0] sm:$0xff]
  %v830 = vld [vmem:[%s2 + $0xd8] sm:$0xff]
  %v831 = vld [vmem:[%s2 + $0xe0] sm:$0xff]
  %v832 = vld [vmem:[%s2 + $0xe8] sm:$0xff]
  %v833 = vld [vmem:[%s2 + $0xf0] sm:$0xff]
  %v834 = vld [vmem:[%s2 + $0xf8] sm:$0xff]
  %v867 = vunpack.c.l.b16 %v803
  %v868 = vunpack.c.h.b16 %v803
  %v869 = vunpack.c.l.b16 %v804
  %v870 = vunpack.c.h.b16 %v804
  %v871 = vunpack.c.l.b16 %v805
  %v872 = vunpack.c.h.b16 %v805
  %v873 = vunpack.c.l.b16 %v806
  %v874 = vunpack.c.h.b16 %v806
  %v875 = vunpack.c.l.b16 %v807
  %v876 = vunpack.c.h.b16 %v807
  %v877 = vunpack.c.l.b16 %v808
  %v878 = vunpack.c.h.b16 %v808
  %v879 = vunpack.c.l.b16 %v809
  %v880 = vunpack.c.h.b16 %v809
  %v881 = vunpack.c.l.b16 %v810
  %v882 = vunpack.c.h.b16 %v810
  %v883 = vunpack.c.l.b16 %v811
  %v884 = vunpack.c.h.b16 %v811
  %v885 = vunpack.c.l.b16 %v812
  %v886 = vunpack.c.h.b16 %v812
  %v887 = vunpack.c.l.b16 %v813
  %v888 = vunpack.c.h.b16 %v813
  %v889 = vunpack.c.l.b16 %v814
  %v890 = vunpack.c.h.b16 %v814
  %v891 = vunpack.c.l.b16 %v815
  %v892 = vunpack.c.h.b16 %v815
  %v893 = vunpack.c.l.b16 %v816
  %v894 = vunpack.c.h.b16 %v816
  %v895 = vunpack.c.l.b16 %v817
  %v896 = vunpack.c.h.b16 %v817
  %v897 = vunpack.c.l.b16 %v818
  %v898 = vunpack.c.h.b16 %v818
  %v899 = vunpack.c.l.b16 %v819
  %v900 = vunpack.c.h.b16 %v819
  %v901 = vunpack.c.l.b16 %v820
  %v902 = vunpack.c.h.b16 %v820
  %v903 = vunpack.c.l.b16 %v821
  %v904 = vunpack.c.h.b16 %v821
  %v905 = vunpack.c.l.b16 %v822
  %v906 = vunpack.c.h.b16 %v822
  %v907 = vunpack.c.l.b16 %v823
  %v908 = vunpack.c.h.b16 %v823
  %v909 = vunpack.c.l.b16 %v824
  %v910 = vunpack.c.h.b16 %v824
  %v911 = vunpack.c.l.b16 %v825
  %v912 = vunpack.c.h.b16 %v825
  %v913 = vunpack.c.l.b16 %v826
  %v914 = vunpack.c.h.b16 %v826
  %v915 = vunpack.c.l.b16 %v827
  %v916 = vunpack.c.h.b16 %v827
  %v917 = vunpack.c.l.b16 %v828
  %v918 = vunpack.c.h.b16 %v828
  %v919 = vunpack.c.l.b16 %v829
  %v920 = vunpack.c.h.b16 %v829
  %v921 = vunpack.c.l.b16 %v830
  %v922 = vunpack.c.h.b16 %v830
  %v923 = vunpack.c.l.b16 %v831
  %v924 = vunpack.c.h.b16 %v831
  %v925 = vunpack.c.l.b16 %v832
  %v926 = vunpack.c.h.b16 %v832
  %v927 = vunpack.c.l.b16 %v833
  %v928 = vunpack.c.h.b16 %v833
  %v929 = vunpack.c.l.b16 %v834
  %v930 = vunpack.c.h.b16 %v834
  %v931 = vpack.c.b16 %v871, %v867
  %v932 = vpack.c.b16 %v872, %v868
  %v933 = vpack.c.b16 %v873, %v869
  %v934 = vpack.c.b16 %v874, %v870
  %v935 = vpack.c.b16 %v879, %v875
  %v936 = vpack.c.b16 %v880, %v876
  %v937 = vpack.c.b16 %v881, %v877
  %v938 = vpack.c.b16 %v882, %v878
  %v939 = vpack.c.b16 %v887, %v883
  %v940 = vpack.c.b16 %v888, %v884
  %v941 = vpack.c.b16 %v889, %v885
  %v942 = vpack.c.b16 %v890, %v886
  %v943 = vpack.c.b16 %v895, %v891
  %v944 = vpack.c.b16 %v896, %v892
  %v945 = vpack.c.b16 %v897, %v893
  %v946 = vpack.c.b16 %v898, %v894
  %v947 = vpack.c.b16 %v903, %v899
  %v948 = vpack.c.b16 %v904, %v900
  %v949 = vpack.c.b16 %v905, %v901
  %v950 = vpack.c.b16 %v906, %v902
  %v951 = vpack.c.b16 %v911, %v907
  %v952 = vpack.c.b16 %v912, %v908
  %v953 = vpack.c.b16 %v913, %v909
  %v954 = vpack.c.b16 %v914, %v910
  %v955 = vpack.c.b16 %v919, %v915
  %v956 = vpack.c.b16 %v920, %v916
  %v957 = vpack.c.b16 %v921, %v917
  %v958 = vpack.c.b16 %v922, %v918
  %v959 = vpack.c.b16 %v927, %v923
  %v960 = vpack.c.b16 %v928, %v924
  %v961 = vpack.c.b16 %v929, %v925
  %v962 = vpack.c.b16 %v930, %v926
  %995 = vmatprep.subr.bf16.mxu0 %v932
  %996 = vmatpush1.bf16.msra.mxu0 %v931
  %997 = vmatprep.subr.bf16.mxu0 %v936
  %998 = vmatpush1.bf16.msra.mxu0 %v935
  %999 = vmatprep.subr.bf16.mxu0 %v940
  %1000 = vmatpush1.bf16.msra.mxu0 %v939
  %1001 = vmatprep.subr.bf16.mxu0 %v944
  %1002 = vmatpush1.bf16.msra.mxu0 %v943
  %1003 = vmatprep.subr.bf16.mxu0 %v948
  %1004 = vmatpush1.bf16.msra.mxu0 %v947
  %1005 = vmatprep.subr.bf16.mxu0 %v952
  %1006 = vmatpush1.bf16.msra.mxu0 %v951
  %1007 = vmatprep.subr.bf16.mxu0 %v956
  %1008 = vmatpush1.bf16.msra.mxu0 %v955
  %1009 = vmatprep.subr.bf16.mxu0 %v960
  %1010 = vmatpush1.bf16.msra.mxu0 %v959
  %1011 = vmatprep.subr.bf16.mxu0 0
  %1012 = vmatpush1.bf16.msra.mxu0 0
  %1013 = vmatprep.subr.bf16.mxu0 0
  %1014 = vmatpush1.bf16.msra.mxu0 0
  %1015 = vmatprep.subr.bf16.mxu0 0
  %1016 = vmatpush1.bf16.msra.mxu0 0
  %1017 = vmatprep.subr.bf16.mxu0 0
  %1018 = vmatpush1.bf16.msra.mxu0 0
  %1019 = vmatprep.subr.bf16.mxu0 0
  %1020 = vmatpush1.bf16.msra.mxu0 0
  %1021 = vmatprep.subr.bf16.mxu0 0
  %1022 = vmatpush1.bf16.msra.mxu0 0
  %1023 = vmatprep.subr.bf16.mxu0 0
  %1024 = vmatpush1.bf16.msra.mxu0 0
  %1025 = vmatprep.subr.bf16.mxu0 0
  %1026 = vmatpush1.bf16.msra.mxu0 0
  %1027 = vmatprep.mubr.bf16.mxu0 0
  %1028 = vmatmul.mubr.bf16.gmra.mrb[0].mxu0 %v802
  %v1029 = vpop.f32.mrb[0].mxu0
  %v1030 = vadd.f32 0.0, %v1029
  %v1031 = vpop.f32.mrb[0].mxu0
  %v1032 = vadd.f32 0.0, %v1031
  %v1033 = vpop.f32.mrb[0].mxu0
  %v1034 = vpop.f32.mrb[0].mxu0
  %1035 = vdwg.mxu0
  %1036 = vmatprep.subr.bf16.mxu0 %v934
  %1037 = vmatpush1.bf16.msra.mxu0 %v933
  %1038 = vmatprep.subr.bf16.mxu0 %v938
  %1039 = vmatpush1.bf16.msra.mxu0 %v937
  %1040 = vmatprep.subr.bf16.mxu0 %v942
  %1041 = vmatpush1.bf16.msra.mxu0 %v941
  %1042 = vmatprep.subr.bf16.mxu0 %v946
  %1043 = vmatpush1.bf16.msra.mxu0 %v945
  %1044 = vmatprep.subr.bf16.mxu0 %v950
  %1045 = vmatpush1.bf16.msra.mxu0 %v949
  %1046 = vmatprep.subr.bf16.mxu0 %v954
  %1047 = vmatpush1.bf16.msra.mxu0 %v953
  %1048 = vmatprep.subr.bf16.mxu0 %v958
  %1049 = vmatpush1.bf16.msra.mxu0 %v957
  %1050 = vmatprep.subr.bf16.mxu0 %v962
  %1051 = vmatpush1.bf16.msra.mxu0 %v961
  %1052 = vmatprep.subr.bf16.mxu0 0
  %1053 = vmatpush1.bf16.msra.mxu0 0
  %1054 = vmatprep.subr.bf16.mxu0 0
  %1055 = vmatpush1.bf16.msra.mxu0 0
  %1056 = vmatprep.subr.bf16.mxu0 0
  %1057 = vmatpush1.bf16.msra.mxu0 0
  %1058 = vmatprep.subr.bf16.mxu0 0
  %1059 = vmatpush1.bf16.msra.mxu0 0
  %1060 = vmatprep.subr.bf16.mxu0 0
  %1061 = vmatpush1.bf16.msra.mxu0 0
  %1062 = vmatprep.subr.bf16.mxu0 0
  %1063 = vmatpush1.bf16.msra.mxu0 0
  %1064 = vmatprep.subr.bf16.mxu0 0
  %1065 = vmatpush1.bf16.msra.mxu0 0
  %1066 = vmatprep.subr.bf16.mxu0 0
  %1067 = vmatpush1.bf16.msra.mxu0 0
  %1068 = vmatprep.mubr.bf16.mxu0 0
  %1069 = vmatmul.mubr.bf16.gmra.mrb[0].mxu0 %v802
  %v1070 = vpop.f32.mrb[0].mxu0
  %v1071 = vadd.f32 0.0, %v1070
  %v1072 = vpop.f32.mrb[0].mxu0
  %v1073 = vadd.f32 0.0, %v1072
  %v1074 = vpop.f32.mrb[0].mxu0
  %v1075 = vpop.f32.mrb[0].mxu0
  %1076 = vdwg.mxu0
  %1077 = vst [vmem:[%s13] sm:$0xff] %v1030
  %1078 = vst [vmem:[%s13 + $0x8] sm:$0xff] %v1032
  %1079 = vst [vmem:[%s13 + $0x10] sm:$0xff] %v1071
  %1080 = vst [vmem:[%s13 + $0x18] sm:$0xff] %v1073
  // Predicated region
  $region54: #{_lambda_.1} parent=0 // pred_check
    _
  $region55: #{_lambda_.1} parent=0 // pred_check_branch
    %1082 = sbr.rel (0) target = $region57
  $region56: #{_lambda_.1} parent=0 // pred_region
    _
  $region57: #{_lambda_.1} parent=0 // pred_fallthru
    _
  // Predicated region
  $region58: #{_lambda_.1} parent=0 // pred_check
    _
  $region59: #{_lambda_.1} parent=0 // pred_check_branch
    %1084 = sbr.rel (0) target = $region61
  $region60: #{_lambda_.1} parent=0 // pred_region
    _
  $region61: #{_lambda_.1} parent=0 // pred_fallthru
    _

</llo_original>
